<compile_context>
chip_gen: v5e
topology: v5e:2x2
jax: 0.10.0
libtpu: 0.0.40
codegen_flags: <defaults>
</compile_context>

<pallas_src>
import functools

import jax
import jax.numpy as jnp
from jax.experimental import pallas as pl
from jax.experimental.pallas import tpu as pltpu

FC1_DIM = 40      # hidden size of fc1 in the PyTorch module
FC1_PAD = 128     # lane-padded fc1 width used inside the kernel (padded cols are exact zeros)


def _sigmoid(z):
    # Reference-only helper: sigmoid(x) = 0.5 * tanh(0.5 * x) + 0.5 (exact, no divide).
    return 0.5 * jnp.tanh(0.5 * z) + 0.5


def _make_lstm_net_kernel(num_layers, T, Bp, H):
    """Builds the fully-unrolled, wavefront-interleaved Pallas kernel body."""
    G = 4 * H

    def kernel(*refs):
        # refs layout:
        #   x_ref (T*Bp, D)                              time-major, batch padded to Bp
        #   wih0 (D, 4H), whh0 (H, 4H), b0 (1, 4H)       layer 0 (i/f/o cols pre-scaled by 0.5)
        #   [wcat_l (2H, 4H), b_l (1, 4H)] * (L-1)       upper layers, W_cat = [W_ih ; W_hh]
        #   fc1w (H, 128), fc1b (1, 128), fc2w (1, 128), fc2b (1, 1)
        #   out_ref (L*Bp, 1)
        x_ref = refs[0]
        wih0, whh0, b0 = refs[1], refs[2], refs[3]
        idx = 4
        upper = []
        for _ in range(num_layers - 1):
            upper.append((refs[idx], refs[idx + 1]))
            idx += 2
        fc1w, fc1b, fc2w, fc2b = refs[idx:idx + 4]
        out_ref = refs[idx + 4]

        # --- Hoisted (once, outside the unrolled time loop) ------------------------------
        # Recurrent weights / biases as values: no per-step VMEM reload on the serial chain.
        whh0_v = whh0[...]                                              # (H, 4H)
        upper_v = [(w[...], b[...]) for (w, b) in upper]                # [(2H,4H), (1,4H)]

        # Lane-constant affine that turns the single full-slab tanh into sigmoid on i/f/o
        # lanes (whose weights/bias were pre-scaled by 0.5): sigmoid(x) = 0.5*tanh(0.5x)+0.5;
        # g-gate lanes keep plain tanh(x).
        lane = jax.lax.broadcasted_iota(jnp.int32, (1, G), 1)
        is_g = jnp.logical_and(lane >= 2 * H, lane < 3 * H)
        a_vec = jnp.where(is_g, 1.0, 0.5).astype(jnp.float32)          # (1, 4H)
        o_vec = jnp.where(is_g, 0.0, 0.5).astype(jnp.float32)          # (1, 4H)

        # Layer-0 input projection (+ merged bias) for ALL timesteps: one batched matmul,
        # entirely off the serial recurrence chain.
        xproj = jnp.dot(x_ref[...], wih0[...],
                        preferred_element_type=jnp.float32) + b0[...]  # (T*Bp, 4H)

        def cell(gates, c_state):
            y = jnp.tanh(gates)                      # single EUP pass over the (Bp, 4H) slab
            slab = y * a_vec + o_vec                 # sigmoid on i/f/o lanes, tanh on g lanes
            i_g = slab[:, 0 * H:1 * H]
            f_g = slab[:, 1 * H:2 * H]
            g_g = slab[:, 2 * H:3 * H]
            o_g = slab[:, 3 * H:4 * H]
            c_new = f_g * c_state + i_g * g_g
            h_new = o_g * jnp.tanh(c_new)
            return h_new, c_new

        # h0 = c0 = 0 (matches torch.zeros init in forward()); carried as register values.
        h = [jnp.zeros((Bp, H), jnp.float32) for _ in range(num_layers)]
        c = [jnp.zeros((Bp, H), jnp.float32) for _ in range(num_layers)]

        # --- Wavefront recurrence: chain length T + L - 1 instead of T * L ----------------
        for t in range(T):
            # Layer 0: hoisted x-projection + per-step recurrent matmul.
            g0 = xproj[t * Bp:(t + 1) * Bp, :] + jnp.dot(
                h[0], whh0_v, preferred_element_type=jnp.float32)       # (Bp, 4H)
            h[0], c[0] = cell(g0, c[0])
            # Layers >= 1: single fused [h_below_t , h_this_{t-1}] @ W_cat matmul.
            for li in range(1, num_layers):
                wcat_v, bl_v = upper_v[li - 1]
                xin = jnp.concatenate([h[li - 1], h[li]], axis=1)       # (Bp, 2H)
                gl = jnp.dot(xin, wcat_v, preferred_element_type=jnp.float32) + bl_v
                h[li], c[li] = cell(gl, c[li])

        # h_n.view(-1, H): layer-major stack of final hidden states -> (L*Bp, H), aligned.
        h_out = jnp.concatenate(h, axis=0)
        z1 = jnp.maximum(
            jnp.dot(h_out, fc1w[...], preferred_element_type=jnp.float32) + fc1b[...],
            0.0)                                                        # (L*Bp, 128) lane-dense
        # fc2 (40 -> 1): VPU multiply + lane reduce (padded lanes are exact zeros).
        out = jnp.sum(z1 * fc2w[...], axis=-1, keepdims=True) + fc2b[...]
        out_ref[...] = out.astype(out_ref.dtype)

    return kernel


def init_params(key, input_size, hidden_size, num_layers):
    """Deterministic parameter init with PyTorch-style shapes and scale."""
    params = {"lstm": []}
    k = 1.0 / jnp.sqrt(hidden_size)
    keys = jax.random.split(key, 4 * num_layers + 4)
    ki = 0
    for layer in range(num_layers):
        d_in = input_size if layer == 0 else hidden_size
        w_ih = jax.random.uniform(keys[ki], (4 * hidden_size, d_in), jnp.float32, -k, k); ki += 1
        w_hh = jax.random.uniform(keys[ki], (4 * hidden_size, hidden_size), jnp.float32, -k, k); ki += 1
        b_ih = jax.random.uniform(keys[ki], (4 * hidden_size,), jnp.float32, -k, k); ki += 1
        b_hh = jax.random.uniform(keys[ki], (4 * hidden_size,), jnp.float32, -k, k); ki += 1
        params["lstm"].append((w_ih, w_hh, b_ih, b_hh))
    k1 = 1.0 / jnp.sqrt(hidden_size)
    params["fc1_w"] = jax.random.uniform(keys[ki], (FC1_DIM, hidden_size), jnp.float32, -k1, k1); ki += 1
    params["fc1_b"] = jax.random.uniform(keys[ki], (FC1_DIM,), jnp.float32, -k1, k1); ki += 1
    k2 = 1.0 / jnp.sqrt(float(FC1_DIM))
    params["fc2_w"] = jax.random.uniform(keys[ki], (1, FC1_DIM), jnp.float32, -k2, k2); ki += 1
    params["fc2_b"] = jax.random.uniform(keys[ki], (1,), jnp.float32, -k2, k2); ki += 1
    return params


def prepare_inputs(params, hidden_size):
    """One-time weight prep (transposes, bias merge, gate pre-scale, W_cat fuse, FC padding).

    Runs OUTSIDE the jitted forward. The i/f/o gate columns of all LSTM weights and biases are
    pre-scaled by 0.5 so the kernel needs a single tanh per gate slab (sigmoid = 0.5*tanh(0.5x)+0.5).
    For layers >= 1, W_ih and W_hh are fused into W_cat = [W_ih ; W_hh] of shape (2H, 4H).
    """
    H = hidden_size
    G = 4 * H
    col_scale = jnp.concatenate([
        jnp.full((H,), 0.5, jnp.float32),   # i
        jnp.full((H,), 0.5, jnp.float32),   # f
        jnp.ones((H,), jnp.float32),        # g (stays tanh)
        jnp.full((H,), 0.5, jnp.float32),   # o
    ])

    def prescale(w):                        # w: (*, 4H)
        return w * col_scale[None, :]

    prepped = []
    for layer, (w_ih, w_hh, b_ih, b_hh) in enumerate(params["lstm"]):
        wih_t = prescale(jnp.transpose(w_ih).astype(jnp.float32))      # (D_in, 4H)
        whh_t = prescale(jnp.transpose(w_hh).astype(jnp.float32))      # (H, 4H)
        b = prescale((b_ih + b_hh).reshape(1, G).astype(jnp.float32))  # (1, 4H)
        if layer == 0:
            prepped += [wih_t, whh_t, b]
        else:
            prepped += [jnp.concatenate([wih_t, whh_t], axis=0), b]    # (2H, 4H), (1, 4H)

    pad = FC1_PAD - FC1_DIM
    fc1w = jnp.pad(jnp.transpose(params["fc1_w"]).astype(jnp.float32), ((0, 0), (0, pad)))   # (H,128)
    fc1b = jnp.pad(params["fc1_b"].astype(jnp.float32), (0, pad)).reshape(1, FC1_PAD)        # (1,128)
    fc2w = jnp.pad(params["fc2_w"].reshape(-1).astype(jnp.float32), (0, pad)).reshape(1, FC1_PAD)
    fc2b = params["fc2_b"].astype(jnp.float32).reshape(1, 1)
    prepped += [fc1w, fc1b, fc2w, fc2b]
    return tuple(prepped)


def lstm_net_forward(x, prepped, *, hidden_size, num_layers):
    """x: (B, T, input_size) float32 (PyTorch batch_first). Returns (num_layers*B, 1)."""
    B, T, D = x.shape
    H = hidden_size
    Bp = ((B + 7) // 8) * 8     # pad batch to a full f32 sublane tile -> aligned slices/stores

    # Time-major, batch zero-padded, flattened: row (t*Bp + b) is timestep t, batch b.
    x_tm = jnp.transpose(x, (1, 0, 2)).astype(jnp.float32)              # (T, B, D)
    x_tm = jnp.pad(x_tm, ((0, 0), (0, Bp - B), (0, 0)))                 # (T, Bp, D)
    x_flat = x_tm.reshape(T * Bp, D)

    kernel = _make_lstm_net_kernel(num_layers, T, Bp, H)
    vmem = pl.BlockSpec(memory_space=pltpu.MemorySpace.VMEM)

    # Advisory cost estimate for the (tiny, latency-dominated) custom call.
    flops = 2 * T * Bp * D * 4 * H                       # hoisted layer-0 input projection
    flops += T * 2 * Bp * H * 4 * H                      # layer-0 recurrent matmul
    flops += (num_layers - 1) * T * 2 * Bp * (2 * H) * 4 * H   # upper-layer fused W_cat matmuls
    flops += 2 * num_layers * Bp * H * FC1_PAD + 2 * num_layers * Bp * FC1_PAD
    transcendentals = num_layers * T * Bp * (4 * H + H)  # one slab tanh + tanh(c) per step
    bytes_accessed = 4 * (x_flat.size + sum(int(p.size) for p in prepped) + num_layers * Bp)

    out_p = pl.pallas_call(
        kernel,
        out_shape=jax.ShapeDtypeStruct((num_layers * Bp, 1), jnp.float32),
        in_specs=[vmem] * (1 + len(prepped)),
        out_specs=vmem,
        cost_estimate=pl.CostEstimate(flops=int(flops),
                                      transcendentals=int(transcendentals),
                                      bytes_accessed=int(bytes_accessed)),
    )(x_flat, *prepped)

    # Drop the padded batch rows (layer-major layout matches h_n.view(-1, H)).
    return out_p.reshape(num_layers, Bp, 1)[:, :B, :].reshape(num_layers * B, 1)


def lstm_net_reference(x, params, hidden_size, num_layers):
    """Pure-JAX reference matching nn.LSTM(batch_first=True) + fc1/relu/fc2."""
    B, T, _ = x.shape
    H = hidden_size
    inp = x
    h_finals = []
    for layer in range(num_layers):
        w_ih, w_hh, b_ih, b_hh = params["lstm"][layer]
        h = jnp.zeros((B, H), jnp.float32)
        c = jnp.zeros((B, H), jnp.float32)
        outs = []
        for t in range(T):
            gates = inp[:, t] @ w_ih.T + b_ih + h @ w_hh.T + b_hh
            i_g = _sigmoid(gates[:, 0 * H:1 * H])
            f_g = _sigmoid(gates[:, 1 * H:2 * H])
            g_g = jnp.tanh(gates[:, 2 * H:3 * H])
            o_g = _sigmoid(gates[:, 3 * H:4 * H])
            c = f_g * c + i_g * g_g
            h = o_g * jnp.tanh(c)
            outs.append(h)
        inp = jnp.stack(outs, axis=1)
        h_finals.append(h)
    h_out = jnp.concatenate(h_finals, axis=0)                   # (num_layers*B, H)
    z1 = jnp.maximum(h_out @ params["fc1_w"].T + params["fc1_b"], 0.0)
    return z1 @ params["fc2_w"].T + params["fc2_b"]


if __name__ == "__main__":
    INPUT_SIZE = 16
    HIDDEN_SIZE = 32
    NUM_LAYERS = 2
    BATCH = 2
    SEQ = 8

    key = jax.random.PRNGKey(0)
    kx, kp = jax.random.split(key)
    x = jax.random.normal(kx, (BATCH, SEQ, INPUT_SIZE), jnp.float32)
    params = init_params(kp, INPUT_SIZE, HIDDEN_SIZE, NUM_LAYERS)
    prepped = prepare_inputs(params, HIDDEN_SIZE)               # one-time weight prep

    fwd = jax.jit(functools.partial(lstm_net_forward,
                                    hidden_size=HIDDEN_SIZE, num_layers=NUM_LAYERS))
    out = jax.block_until_ready(fwd(x, prepped))

    ref = lstm_net_reference(x, params, HIDDEN_SIZE, NUM_LAYERS)
    assert out.shape == (NUM_LAYERS * BATCH, 1), out.shape
    assert jnp.allclose(out, ref, rtol=1e-4, atol=1e-5), (out, ref)

    print("KERNEL_OK")
</pallas_src>

<mosaic_0001>
module attributes {stable_mosaic.version = 11 : i64} {
  func.func @kernel(%arg0: memref<64x16xf32, #tpu.memory_space<vmem>>, %arg1: memref<16x128xf32, #tpu.memory_space<vmem>>, %arg2: memref<32x128xf32, #tpu.memory_space<vmem>>, %arg3: memref<1x128xf32, #tpu.memory_space<vmem>>, %arg4: memref<64x128xf32, #tpu.memory_space<vmem>>, %arg5: memref<1x128xf32, #tpu.memory_space<vmem>>, %arg6: memref<32x128xf32, #tpu.memory_space<vmem>>, %arg7: memref<1x128xf32, #tpu.memory_space<vmem>>, %arg8: memref<1x128xf32, #tpu.memory_space<vmem>>, %arg9: memref<1x1xf32, #tpu.memory_space<vmem>>, %arg10: memref<16x1xf32, #tpu.memory_space<vmem>>) attributes {dimension_semantics = [], scalar_prefetch = 0 : i64, scratch_operands = 0 : i64, tpu.core_type = #tpu.core_type<tc>} {
    %c0 = arith.constant 0 : index
    %c0_0 = arith.constant 0 : index
    %0 = vector.load %arg2[%c0, %c0_0] : memref<32x128xf32, #tpu.memory_space<vmem>>, vector<32x128xf32>
    %c0_1 = arith.constant 0 : index
    %c0_2 = arith.constant 0 : index
    %1 = vector.load %arg4[%c0_1, %c0_2] : memref<64x128xf32, #tpu.memory_space<vmem>>, vector<64x128xf32>
    %c0_3 = arith.constant 0 : index
    %c0_4 = arith.constant 0 : index
    %2 = vector.load %arg5[%c0_3, %c0_4] : memref<1x128xf32, #tpu.memory_space<vmem>>, vector<1x128xf32>
    %3 = tpu.iota {dimensions = array<i32: 1>} : vector<1x128xi32>
    %c64_i32 = arith.constant 64 : i32
    %4 = vector.broadcast %c64_i32 : i32 to vector<1x128xi32>
    %5 = arith.cmpi sge, %3, %4 : vector<1x128xi32>
    %c96_i32 = arith.constant 96 : i32
    %6 = vector.broadcast %c96_i32 : i32 to vector<1x128xi32>
    %7 = arith.cmpi slt, %3, %6 : vector<1x128xi32>
    %8 = arith.andi %5, %7 : vector<1x128xi1>
    %cst = arith.constant 1.000000e+00 : f32
    %cst_5 = arith.constant 5.000000e-01 : f32
    %9 = vector.broadcast %cst : f32 to vector<1x128xf32>
    %10 = vector.broadcast %cst_5 : f32 to vector<1x128xf32>
    %11 = arith.select %8, %9, %10 : vector<1x128xi1>, vector<1x128xf32>
    %cst_6 = arith.constant 0.000000e+00 : f32
    %cst_7 = arith.constant 5.000000e-01 : f32
    %12 = vector.broadcast %cst_6 : f32 to vector<1x128xf32>
    %13 = vector.broadcast %cst_7 : f32 to vector<1x128xf32>
    %14 = arith.select %8, %12, %13 : vector<1x128xi1>, vector<1x128xf32>
    %c0_8 = arith.constant 0 : index
    %c0_9 = arith.constant 0 : index
    %15 = vector.load %arg0[%c0_8, %c0_9] : memref<64x16xf32, #tpu.memory_space<vmem>>, vector<64x16xf32>
    %c0_10 = arith.constant 0 : index
    %c0_11 = arith.constant 0 : index
    %16 = vector.load %arg1[%c0_10, %c0_11] : memref<16x128xf32, #tpu.memory_space<vmem>>, vector<16x128xf32>
    %cst_12 = arith.constant dense<0.000000e+00> : vector<64x128xf32>
    %17 = tpu.matmul %15, %16, %cst_12 {dimension_numbers = #tpu.dot_dimension_numbers<[1], [0], [0], [1], [0, 0, 1, 1], [], []>} : vector<64x16xf32>, vector<16x128xf32>, vector<64x128xf32> -> vector<64x128xf32>
    %c0_13 = arith.constant 0 : index
    %c0_14 = arith.constant 0 : index
    %18 = vector.load %arg3[%c0_13, %c0_14] : memref<1x128xf32, #tpu.memory_space<vmem>>, vector<1x128xf32>
    %19 = vector.broadcast %18 : vector<1x128xf32> to vector<64x128xf32>
    %20 = arith.addf %17, %19 : vector<64x128xf32>
    %cst_15 = arith.constant 0.000000e+00 : f32
    %21 = vector.broadcast %cst_15 : f32 to vector<8x32xf32>
    %cst_16 = arith.constant 0.000000e+00 : f32
    %22 = vector.broadcast %cst_16 : f32 to vector<8x32xf32>
    %cst_17 = arith.constant 0.000000e+00 : f32
    %23 = vector.broadcast %cst_17 : f32 to vector<8x32xf32>
    %cst_18 = arith.constant 0.000000e+00 : f32
    %24 = vector.broadcast %cst_18 : f32 to vector<8x32xf32>
    %25 = vector.extract_strided_slice %20 {offsets = [0, 0], sizes = [8, 128], strides = [1, 1]} : vector<64x128xf32> to vector<8x128xf32>
    %cst_19 = arith.constant dense<0.000000e+00> : vector<8x128xf32>
    %26 = tpu.matmul %21, %0, %cst_19 {dimension_numbers = #tpu.dot_dimension_numbers<[1], [0], [0], [1], [0, 0, 1, 1], [], []>} : vector<8x32xf32>, vector<32x128xf32>, vector<8x128xf32> -> vector<8x128xf32>
    %27 = arith.addf %25, %26 : vector<8x128xf32>
    %28 = math.tanh %27 : vector<8x128xf32>
    %29 = vector.broadcast %11 : vector<1x128xf32> to vector<8x128xf32>
    %30 = arith.mulf %28, %29 : vector<8x128xf32>
    %31 = vector.broadcast %14 : vector<1x128xf32> to vector<8x128xf32>
    %32 = arith.addf %30, %31 : vector<8x128xf32>
    %33 = vector.extract_strided_slice %32 {offsets = [0, 0], sizes = [8, 32], strides = [1, 1]} : vector<8x128xf32> to vector<8x32xf32>
    %34 = vector.extract_strided_slice %32 {offsets = [0, 32], sizes = [8, 32], strides = [1, 1]} : vector<8x128xf32> to vector<8x32xf32>
    %35 = vector.extract_strided_slice %32 {offsets = [0, 64], sizes = [8, 32], strides = [1, 1]} : vector<8x128xf32> to vector<8x32xf32>
    %36 = vector.extract_strided_slice %32 {offsets = [0, 96], sizes = [8, 32], strides = [1, 1]} : vector<8x128xf32> to vector<8x32xf32>
    %37 = arith.mulf %34, %23 : vector<8x32xf32>
    %38 = arith.mulf %33, %35 : vector<8x32xf32>
    %39 = arith.addf %37, %38 : vector<8x32xf32>
    %40 = math.tanh %39 : vector<8x32xf32>
    %41 = arith.mulf %36, %40 : vector<8x32xf32>
    %42 = tpu.concatenate %41, %22 in 1 : vector<8x32xf32>, vector<8x32xf32> -> vector<8x64xf32>
    %cst_20 = arith.constant dense<0.000000e+00> : vector<8x128xf32>
    %43 = tpu.matmul %42, %1, %cst_20 {dimension_numbers = #tpu.dot_dimension_numbers<[1], [0], [0], [1], [0, 0, 1, 1], [], []>} : vector<8x64xf32>, vector<64x128xf32>, vector<8x128xf32> -> vector<8x128xf32>
    %44 = vector.broadcast %2 : vector<1x128xf32> to vector<8x128xf32>
    %45 = arith.addf %43, %44 : vector<8x128xf32>
    %46 = math.tanh %45 : vector<8x128xf32>
    %47 = vector.broadcast %11 : vector<1x128xf32> to vector<8x128xf32>
    %48 = arith.mulf %46, %47 : vector<8x128xf32>
    %49 = vector.broadcast %14 : vector<1x128xf32> to vector<8x128xf32>
    %50 = arith.addf %48, %49 : vector<8x128xf32>
    %51 = vector.extract_strided_slice %50 {offsets = [0, 0], sizes = [8, 32], strides = [1, 1]} : vector<8x128xf32> to vector<8x32xf32>
    %52 = vector.extract_strided_slice %50 {offsets = [0, 32], sizes = [8, 32], strides = [1, 1]} : vector<8x128xf32> to vector<8x32xf32>
    %53 = vector.extract_strided_slice %50 {offsets = [0, 64], sizes = [8, 32], strides = [1, 1]} : vector<8x128xf32> to vector<8x32xf32>
    %54 = vector.extract_strided_slice %50 {offsets = [0, 96], sizes = [8, 32], strides = [1, 1]} : vector<8x128xf32> to vector<8x32xf32>
    %55 = arith.mulf %52, %24 : vector<8x32xf32>
    %56 = arith.mulf %51, %53 : vector<8x32xf32>
    %57 = arith.addf %55, %56 : vector<8x32xf32>
    %58 = math.tanh %57 : vector<8x32xf32>
    %59 = arith.mulf %54, %58 : vector<8x32xf32>
    %60 = vector.extract_strided_slice %20 {offsets = [8, 0], sizes = [8, 128], strides = [1, 1]} : vector<64x128xf32> to vector<8x128xf32>
    %cst_21 = arith.constant dense<0.000000e+00> : vector<8x128xf32>
    %61 = tpu.matmul %41, %0, %cst_21 {dimension_numbers = #tpu.dot_dimension_numbers<[1], [0], [0], [1], [0, 0, 1, 1], [], []>} : vector<8x32xf32>, vector<32x128xf32>, vector<8x128xf32> -> vector<8x128xf32>
    %62 = arith.addf %60, %61 : vector<8x128xf32>
    %63 = math.tanh %62 : vector<8x128xf32>
    %64 = vector.broadcast %11 : vector<1x128xf32> to vector<8x128xf32>
    %65 = arith.mulf %63, %64 : vector<8x128xf32>
    %66 = vector.broadcast %14 : vector<1x128xf32> to vector<8x128xf32>
    %67 = arith.addf %65, %66 : vector<8x128xf32>
    %68 = vector.extract_strided_slice %67 {offsets = [0, 0], sizes = [8, 32], strides = [1, 1]} : vector<8x128xf32> to vector<8x32xf32>
    %69 = vector.extract_strided_slice %67 {offsets = [0, 32], sizes = [8, 32], strides = [1, 1]} : vector<8x128xf32> to vector<8x32xf32>
    %70 = vector.extract_strided_slice %67 {offsets = [0, 64], sizes = [8, 32], strides = [1, 1]} : vector<8x128xf32> to vector<8x32xf32>
    %71 = vector.extract_strided_slice %67 {offsets = [0, 96], sizes = [8, 32], strides = [1, 1]} : vector<8x128xf32> to vector<8x32xf32>
    %72 = arith.mulf %69, %39 : vector<8x32xf32>
    %73 = arith.mulf %68, %70 : vector<8x32xf32>
    %74 = arith.addf %72, %73 : vector<8x32xf32>
    %75 = math.tanh %74 : vector<8x32xf32>
    %76 = arith.mulf %71, %75 : vector<8x32xf32>
    %77 = tpu.concatenate %76, %59 in 1 : vector<8x32xf32>, vector<8x32xf32> -> vector<8x64xf32>
    %cst_22 = arith.constant dense<0.000000e+00> : vector<8x128xf32>
    %78 = tpu.matmul %77, %1, %cst_22 {dimension_numbers = #tpu.dot_dimension_numbers<[1], [0], [0], [1], [0, 0, 1, 1], [], []>} : vector<8x64xf32>, vector<64x128xf32>, vector<8x128xf32> -> vector<8x128xf32>
    %79 = vector.broadcast %2 : vector<1x128xf32> to vector<8x128xf32>
    %80 = arith.addf %78, %79 : vector<8x128xf32>
    %81 = math.tanh %80 : vector<8x128xf32>
    %82 = vector.broadcast %11 : vector<1x128xf32> to vector<8x128xf32>
    %83 = arith.mulf %81, %82 : vector<8x128xf32>
    %84 = vector.broadcast %14 : vector<1x128xf32> to vector<8x128xf32>
    %85 = arith.addf %83, %84 : vector<8x128xf32>
    %86 = vector.extract_strided_slice %85 {offsets = [0, 0], sizes = [8, 32], strides = [1, 1]} : vector<8x128xf32> to vector<8x32xf32>
    %87 = vector.extract_strided_slice %85 {offsets = [0, 32], sizes = [8, 32], strides = [1, 1]} : vector<8x128xf32> to vector<8x32xf32>
    %88 = vector.extract_strided_slice %85 {offsets = [0, 64], sizes = [8, 32], strides = [1, 1]} : vector<8x128xf32> to vector<8x32xf32>
    %89 = vector.extract_strided_slice %85 {offsets = [0, 96], sizes = [8, 32], strides = [1, 1]} : vector<8x128xf32> to vector<8x32xf32>
    %90 = arith.mulf %87, %57 : vector<8x32xf32>
    %91 = arith.mulf %86, %88 : vector<8x32xf32>
    %92 = arith.addf %90, %91 : vector<8x32xf32>
    %93 = math.tanh %92 : vector<8x32xf32>
    %94 = arith.mulf %89, %93 : vector<8x32xf32>
    %95 = vector.extract_strided_slice %20 {offsets = [16, 0], sizes = [8, 128], strides = [1, 1]} : vector<64x128xf32> to vector<8x128xf32>
    %cst_23 = arith.constant dense<0.000000e+00> : vector<8x128xf32>
    %96 = tpu.matmul %76, %0, %cst_23 {dimension_numbers = #tpu.dot_dimension_numbers<[1], [0], [0], [1], [0, 0, 1, 1], [], []>} : vector<8x32xf32>, vector<32x128xf32>, vector<8x128xf32> -> vector<8x128xf32>
    %97 = arith.addf %95, %96 : vector<8x128xf32>
    %98 = math.tanh %97 : vector<8x128xf32>
    %99 = vector.broadcast %11 : vector<1x128xf32> to vector<8x128xf32>
    %100 = arith.mulf %98, %99 : vector<8x128xf32>
    %101 = vector.broadcast %14 : vector<1x128xf32> to vector<8x128xf32>
    %102 = arith.addf %100, %101 : vector<8x128xf32>
    %103 = vector.extract_strided_slice %102 {offsets = [0, 0], sizes = [8, 32], strides = [1, 1]} : vector<8x128xf32> to vector<8x32xf32>
    %104 = vector.extract_strided_slice %102 {offsets = [0, 32], sizes = [8, 32], strides = [1, 1]} : vector<8x128xf32> to vector<8x32xf32>
    %105 = vector.extract_strided_slice %102 {offsets = [0, 64], sizes = [8, 32], strides = [1, 1]} : vector<8x128xf32> to vector<8x32xf32>
    %106 = vector.extract_strided_slice %102 {offsets = [0, 96], sizes = [8, 32], strides = [1, 1]} : vector<8x128xf32> to vector<8x32xf32>
    %107 = arith.mulf %104, %74 : vector<8x32xf32>
    %108 = arith.mulf %103, %105 : vector<8x32xf32>
    %109 = arith.addf %107, %108 : vector<8x32xf32>
    %110 = math.tanh %109 : vector<8x32xf32>
    %111 = arith.mulf %106, %110 : vector<8x32xf32>
    %112 = tpu.concatenate %111, %94 in 1 : vector<8x32xf32>, vector<8x32xf32> -> vector<8x64xf32>
    %cst_24 = arith.constant dense<0.000000e+00> : vector<8x128xf32>
    %113 = tpu.matmul %112, %1, %cst_24 {dimension_numbers = #tpu.dot_dimension_numbers<[1], [0], [0], [1], [0, 0, 1, 1], [], []>} : vector<8x64xf32>, vector<64x128xf32>, vector<8x128xf32> -> vector<8x128xf32>
    %114 = vector.broadcast %2 : vector<1x128xf32> to vector<8x128xf32>
    %115 = arith.addf %113, %114 : vector<8x128xf32>
    %116 = math.tanh %115 : vector<8x128xf32>
    %117 = vector.broadcast %11 : vector<1x128xf32> to vector<8x128xf32>
    %118 = arith.mulf %116, %117 : vector<8x128xf32>
    %119 = vector.broadcast %14 : vector<1x128xf32> to vector<8x128xf32>
    %120 = arith.addf %118, %119 : vector<8x128xf32>
    %121 = vector.extract_strided_slice %120 {offsets = [0, 0], sizes = [8, 32], strides = [1, 1]} : vector<8x128xf32> to vector<8x32xf32>
    %122 = vector.extract_strided_slice %120 {offsets = [0, 32], sizes = [8, 32], strides = [1, 1]} : vector<8x128xf32> to vector<8x32xf32>
    %123 = vector.extract_strided_slice %120 {offsets = [0, 64], sizes = [8, 32], strides = [1, 1]} : vector<8x128xf32> to vector<8x32xf32>
    %124 = vector.extract_strided_slice %120 {offsets = [0, 96], sizes = [8, 32], strides = [1, 1]} : vector<8x128xf32> to vector<8x32xf32>
    %125 = arith.mulf %122, %92 : vector<8x32xf32>
    %126 = arith.mulf %121, %123 : vector<8x32xf32>
    %127 = arith.addf %125, %126 : vector<8x32xf32>
    %128 = math.tanh %127 : vector<8x32xf32>
    %129 = arith.mulf %124, %128 : vector<8x32xf32>
    %130 = vector.extract_strided_slice %20 {offsets = [24, 0], sizes = [8, 128], strides = [1, 1]} : vector<64x128xf32> to vector<8x128xf32>
    %cst_25 = arith.constant dense<0.000000e+00> : vector<8x128xf32>
    %131 = tpu.matmul %111, %0, %cst_25 {dimension_numbers = #tpu.dot_dimension_numbers<[1], [0], [0], [1], [0, 0, 1, 1], [], []>} : vector<8x32xf32>, vector<32x128xf32>, vector<8x128xf32> -> vector<8x128xf32>
    %132 = arith.addf %130, %131 : vector<8x128xf32>
    %133 = math.tanh %132 : vector<8x128xf32>
    %134 = vector.broadcast %11 : vector<1x128xf32> to vector<8x128xf32>
    %135 = arith.mulf %133, %134 : vector<8x128xf32>
    %136 = vector.broadcast %14 : vector<1x128xf32> to vector<8x128xf32>
    %137 = arith.addf %135, %136 : vector<8x128xf32>
    %138 = vector.extract_strided_slice %137 {offsets = [0, 0], sizes = [8, 32], strides = [1, 1]} : vector<8x128xf32> to vector<8x32xf32>
    %139 = vector.extract_strided_slice %137 {offsets = [0, 32], sizes = [8, 32], strides = [1, 1]} : vector<8x128xf32> to vector<8x32xf32>
    %140 = vector.extract_strided_slice %137 {offsets = [0, 64], sizes = [8, 32], strides = [1, 1]} : vector<8x128xf32> to vector<8x32xf32>
    %141 = vector.extract_strided_slice %137 {offsets = [0, 96], sizes = [8, 32], strides = [1, 1]} : vector<8x128xf32> to vector<8x32xf32>
    %142 = arith.mulf %139, %109 : vector<8x32xf32>
    %143 = arith.mulf %138, %140 : vector<8x32xf32>
    %144 = arith.addf %142, %143 : vector<8x32xf32>
    %145 = math.tanh %144 : vector<8x32xf32>
    %146 = arith.mulf %141, %145 : vector<8x32xf32>
    %147 = tpu.concatenate %146, %129 in 1 : vector<8x32xf32>, vector<8x32xf32> -> vector<8x64xf32>
    %cst_26 = arith.constant dense<0.000000e+00> : vector<8x128xf32>
    %148 = tpu.matmul %147, %1, %cst_26 {dimension_numbers = #tpu.dot_dimension_numbers<[1], [0], [0], [1], [0, 0, 1, 1], [], []>} : vector<8x64xf32>, vector<64x128xf32>, vector<8x128xf32> -> vector<8x128xf32>
    %149 = vector.broadcast %2 : vector<1x128xf32> to vector<8x128xf32>
    %150 = arith.addf %148, %149 : vector<8x128xf32>
    %151 = math.tanh %150 : vector<8x128xf32>
    %152 = vector.broadcast %11 : vector<1x128xf32> to vector<8x128xf32>
    %153 = arith.mulf %151, %152 : vector<8x128xf32>
    %154 = vector.broadcast %14 : vector<1x128xf32> to vector<8x128xf32>
    %155 = arith.addf %153, %154 : vector<8x128xf32>
    %156 = vector.extract_strided_slice %155 {offsets = [0, 0], sizes = [8, 32], strides = [1, 1]} : vector<8x128xf32> to vector<8x32xf32>
    %157 = vector.extract_strided_slice %155 {offsets = [0, 32], sizes = [8, 32], strides = [1, 1]} : vector<8x128xf32> to vector<8x32xf32>
    %158 = vector.extract_strided_slice %155 {offsets = [0, 64], sizes = [8, 32], strides = [1, 1]} : vector<8x128xf32> to vector<8x32xf32>
    %159 = vector.extract_strided_slice %155 {offsets = [0, 96], sizes = [8, 32], strides = [1, 1]} : vector<8x128xf32> to vector<8x32xf32>
    %160 = arith.mulf %157, %127 : vector<8x32xf32>
    %161 = arith.mulf %156, %158 : vector<8x32xf32>
    %162 = arith.addf %160, %161 : vector<8x32xf32>
    %163 = math.tanh %162 : vector<8x32xf32>
    %164 = arith.mulf %159, %163 : vector<8x32xf32>
    %165 = vector.extract_strided_slice %20 {offsets = [32, 0], sizes = [8, 128], strides = [1, 1]} : vector<64x128xf32> to vector<8x128xf32>
    %cst_27 = arith.constant dense<0.000000e+00> : vector<8x128xf32>
    %166 = tpu.matmul %146, %0, %cst_27 {dimension_numbers = #tpu.dot_dimension_numbers<[1], [0], [0], [1], [0, 0, 1, 1], [], []>} : vector<8x32xf32>, vector<32x128xf32>, vector<8x128xf32> -> vector<8x128xf32>
    %167 = arith.addf %165, %166 : vector<8x128xf32>
    %168 = math.tanh %167 : vector<8x128xf32>
    %169 = vector.broadcast %11 : vector<1x128xf32> to vector<8x128xf32>
    %170 = arith.mulf %168, %169 : vector<8x128xf32>
    %171 = vector.broadcast %14 : vector<1x128xf32> to vector<8x128xf32>
    %172 = arith.addf %170, %171 : vector<8x128xf32>
    %173 = vector.extract_strided_slice %172 {offsets = [0, 0], sizes = [8, 32], strides = [1, 1]} : vector<8x128xf32> to vector<8x32xf32>
    %174 = vector.extract_strided_slice %172 {offsets = [0, 32], sizes = [8, 32], strides = [1, 1]} : vector<8x128xf32> to vector<8x32xf32>
    %175 = vector.extract_strided_slice %172 {offsets = [0, 64], sizes = [8, 32], strides = [1, 1]} : vector<8x128xf32> to vector<8x32xf32>
    %176 = vector.extract_strided_slice %172 {offsets = [0, 96], sizes = [8, 32], strides = [1, 1]} : vector<8x128xf32> to vector<8x32xf32>
    %177 = arith.mulf %174, %144 : vector<8x32xf32>
    %178 = arith.mulf %173, %175 : vector<8x32xf32>
    %179 = arith.addf %177, %178 : vector<8x32xf32>
    %180 = math.tanh %179 : vector<8x32xf32>
    %181 = arith.mulf %176, %180 : vector<8x32xf32>
    %182 = tpu.concatenate %181, %164 in 1 : vector<8x32xf32>, vector<8x32xf32> -> vector<8x64xf32>
    %cst_28 = arith.constant dense<0.000000e+00> : vector<8x128xf32>
    %183 = tpu.matmul %182, %1, %cst_28 {dimension_numbers = #tpu.dot_dimension_numbers<[1], [0], [0], [1], [0, 0, 1, 1], [], []>} : vector<8x64xf32>, vector<64x128xf32>, vector<8x128xf32> -> vector<8x128xf32>
    %184 = vector.broadcast %2 : vector<1x128xf32> to vector<8x128xf32>
    %185 = arith.addf %183, %184 : vector<8x128xf32>
    %186 = math.tanh %185 : vector<8x128xf32>
    %187 = vector.broadcast %11 : vector<1x128xf32> to vector<8x128xf32>
    %188 = arith.mulf %186, %187 : vector<8x128xf32>
    %189 = vector.broadcast %14 : vector<1x128xf32> to vector<8x128xf32>
    %190 = arith.addf %188, %189 : vector<8x128xf32>
    %191 = vector.extract_strided_slice %190 {offsets = [0, 0], sizes = [8, 32], strides = [1, 1]} : vector<8x128xf32> to vector<8x32xf32>
    %192 = vector.extract_strided_slice %190 {offsets = [0, 32], sizes = [8, 32], strides = [1, 1]} : vector<8x128xf32> to vector<8x32xf32>
    %193 = vector.extract_strided_slice %190 {offsets = [0, 64], sizes = [8, 32], strides = [1, 1]} : vector<8x128xf32> to vector<8x32xf32>
    %194 = vector.extract_strided_slice %190 {offsets = [0, 96], sizes = [8, 32], strides = [1, 1]} : vector<8x128xf32> to vector<8x32xf32>
    %195 = arith.mulf %192, %162 : vector<8x32xf32>
    %196 = arith.mulf %191, %193 : vector<8x32xf32>
    %197 = arith.addf %195, %196 : vector<8x32xf32>
    %198 = math.tanh %197 : vector<8x32xf32>
    %199 = arith.mulf %194, %198 : vector<8x32xf32>
    %200 = vector.extract_strided_slice %20 {offsets = [40, 0], sizes = [8, 128], strides = [1, 1]} : vector<64x128xf32> to vector<8x128xf32>
    %cst_29 = arith.constant dense<0.000000e+00> : vector<8x128xf32>
    %201 = tpu.matmul %181, %0, %cst_29 {dimension_numbers = #tpu.dot_dimension_numbers<[1], [0], [0], [1], [0, 0, 1, 1], [], []>} : vector<8x32xf32>, vector<32x128xf32>, vector<8x128xf32> -> vector<8x128xf32>
    %202 = arith.addf %200, %201 : vector<8x128xf32>
    %203 = math.tanh %202 : vector<8x128xf32>
    %204 = vector.broadcast %11 : vector<1x128xf32> to vector<8x128xf32>
    %205 = arith.mulf %203, %204 : vector<8x128xf32>
    %206 = vector.broadcast %14 : vector<1x128xf32> to vector<8x128xf32>
    %207 = arith.addf %205, %206 : vector<8x128xf32>
    %208 = vector.extract_strided_slice %207 {offsets = [0, 0], sizes = [8, 32], strides = [1, 1]} : vector<8x128xf32> to vector<8x32xf32>
    %209 = vector.extract_strided_slice %207 {offsets = [0, 32], sizes = [8, 32], strides = [1, 1]} : vector<8x128xf32> to vector<8x32xf32>
    %210 = vector.extract_strided_slice %207 {offsets = [0, 64], sizes = [8, 32], strides = [1, 1]} : vector<8x128xf32> to vector<8x32xf32>
    %211 = vector.extract_strided_slice %207 {offsets = [0, 96], sizes = [8, 32], strides = [1, 1]} : vector<8x128xf32> to vector<8x32xf32>
    %212 = arith.mulf %209, %179 : vector<8x32xf32>
    %213 = arith.mulf %208, %210 : vector<8x32xf32>
    %214 = arith.addf %212, %213 : vector<8x32xf32>
    %215 = math.tanh %214 : vector<8x32xf32>
    %216 = arith.mulf %211, %215 : vector<8x32xf32>
    %217 = tpu.concatenate %216, %199 in 1 : vector<8x32xf32>, vector<8x32xf32> -> vector<8x64xf32>
    %cst_30 = arith.constant dense<0.000000e+00> : vector<8x128xf32>
    %218 = tpu.matmul %217, %1, %cst_30 {dimension_numbers = #tpu.dot_dimension_numbers<[1], [0], [0], [1], [0, 0, 1, 1], [], []>} : vector<8x64xf32>, vector<64x128xf32>, vector<8x128xf32> -> vector<8x128xf32>
    %219 = vector.broadcast %2 : vector<1x128xf32> to vector<8x128xf32>
    %220 = arith.addf %218, %219 : vector<8x128xf32>
    %221 = math.tanh %220 : vector<8x128xf32>
    %222 = vector.broadcast %11 : vector<1x128xf32> to vector<8x128xf32>
    %223 = arith.mulf %221, %222 : vector<8x128xf32>
    %224 = vector.broadcast %14 : vector<1x128xf32> to vector<8x128xf32>
    %225 = arith.addf %223, %224 : vector<8x128xf32>
    %226 = vector.extract_strided_slice %225 {offsets = [0, 0], sizes = [8, 32], strides = [1, 1]} : vector<8x128xf32> to vector<8x32xf32>
    %227 = vector.extract_strided_slice %225 {offsets = [0, 32], sizes = [8, 32], strides = [1, 1]} : vector<8x128xf32> to vector<8x32xf32>
    %228 = vector.extract_strided_slice %225 {offsets = [0, 64], sizes = [8, 32], strides = [1, 1]} : vector<8x128xf32> to vector<8x32xf32>
    %229 = vector.extract_strided_slice %225 {offsets = [0, 96], sizes = [8, 32], strides = [1, 1]} : vector<8x128xf32> to vector<8x32xf32>
    %230 = arith.mulf %227, %197 : vector<8x32xf32>
    %231 = arith.mulf %226, %228 : vector<8x32xf32>
    %232 = arith.addf %230, %231 : vector<8x32xf32>
    %233 = math.tanh %232 : vector<8x32xf32>
    %234 = arith.mulf %229, %233 : vector<8x32xf32>
    %235 = vector.extract_strided_slice %20 {offsets = [48, 0], sizes = [8, 128], strides = [1, 1]} : vector<64x128xf32> to vector<8x128xf32>
    %cst_31 = arith.constant dense<0.000000e+00> : vector<8x128xf32>
    %236 = tpu.matmul %216, %0, %cst_31 {dimension_numbers = #tpu.dot_dimension_numbers<[1], [0], [0], [1], [0, 0, 1, 1], [], []>} : vector<8x32xf32>, vector<32x128xf32>, vector<8x128xf32> -> vector<8x128xf32>
    %237 = arith.addf %235, %236 : vector<8x128xf32>
    %238 = math.tanh %237 : vector<8x128xf32>
    %239 = vector.broadcast %11 : vector<1x128xf32> to vector<8x128xf32>
    %240 = arith.mulf %238, %239 : vector<8x128xf32>
    %241 = vector.broadcast %14 : vector<1x128xf32> to vector<8x128xf32>
    %242 = arith.addf %240, %241 : vector<8x128xf32>
    %243 = vector.extract_strided_slice %242 {offsets = [0, 0], sizes = [8, 32], strides = [1, 1]} : vector<8x128xf32> to vector<8x32xf32>
    %244 = vector.extract_strided_slice %242 {offsets = [0, 32], sizes = [8, 32], strides = [1, 1]} : vector<8x128xf32> to vector<8x32xf32>
    %245 = vector.extract_strided_slice %242 {offsets = [0, 64], sizes = [8, 32], strides = [1, 1]} : vector<8x128xf32> to vector<8x32xf32>
    %246 = vector.extract_strided_slice %242 {offsets = [0, 96], sizes = [8, 32], strides = [1, 1]} : vector<8x128xf32> to vector<8x32xf32>
    %247 = arith.mulf %244, %214 : vector<8x32xf32>
    %248 = arith.mulf %243, %245 : vector<8x32xf32>
    %249 = arith.addf %247, %248 : vector<8x32xf32>
    %250 = math.tanh %249 : vector<8x32xf32>
    %251 = arith.mulf %246, %250 : vector<8x32xf32>
    %252 = tpu.concatenate %251, %234 in 1 : vector<8x32xf32>, vector<8x32xf32> -> vector<8x64xf32>
    %cst_32 = arith.constant dense<0.000000e+00> : vector<8x128xf32>
    %253 = tpu.matmul %252, %1, %cst_32 {dimension_numbers = #tpu.dot_dimension_numbers<[1], [0], [0], [1], [0, 0, 1, 1], [], []>} : vector<8x64xf32>, vector<64x128xf32>, vector<8x128xf32> -> vector<8x128xf32>
    %254 = vector.broadcast %2 : vector<1x128xf32> to vector<8x128xf32>
    %255 = arith.addf %253, %254 : vector<8x128xf32>
    %256 = math.tanh %255 : vector<8x128xf32>
    %257 = vector.broadcast %11 : vector<1x128xf32> to vector<8x128xf32>
    %258 = arith.mulf %256, %257 : vector<8x128xf32>
    %259 = vector.broadcast %14 : vector<1x128xf32> to vector<8x128xf32>
    %260 = arith.addf %258, %259 : vector<8x128xf32>
    %261 = vector.extract_strided_slice %260 {offsets = [0, 0], sizes = [8, 32], strides = [1, 1]} : vector<8x128xf32> to vector<8x32xf32>
    %262 = vector.extract_strided_slice %260 {offsets = [0, 32], sizes = [8, 32], strides = [1, 1]} : vector<8x128xf32> to vector<8x32xf32>
    %263 = vector.extract_strided_slice %260 {offsets = [0, 64], sizes = [8, 32], strides = [1, 1]} : vector<8x128xf32> to vector<8x32xf32>
    %264 = vector.extract_strided_slice %260 {offsets = [0, 96], sizes = [8, 32], strides = [1, 1]} : vector<8x128xf32> to vector<8x32xf32>
    %265 = arith.mulf %262, %232 : vector<8x32xf32>
    %266 = arith.mulf %261, %263 : vector<8x32xf32>
    %267 = arith.addf %265, %266 : vector<8x32xf32>
    %268 = math.tanh %267 : vector<8x32xf32>
    %269 = arith.mulf %264, %268 : vector<8x32xf32>
    %270 = vector.extract_strided_slice %20 {offsets = [56, 0], sizes = [8, 128], strides = [1, 1]} : vector<64x128xf32> to vector<8x128xf32>
    %cst_33 = arith.constant dense<0.000000e+00> : vector<8x128xf32>
    %271 = tpu.matmul %251, %0, %cst_33 {dimension_numbers = #tpu.dot_dimension_numbers<[1], [0], [0], [1], [0, 0, 1, 1], [], []>} : vector<8x32xf32>, vector<32x128xf32>, vector<8x128xf32> -> vector<8x128xf32>
    %272 = arith.addf %270, %271 : vector<8x128xf32>
    %273 = math.tanh %272 : vector<8x128xf32>
    %274 = vector.broadcast %11 : vector<1x128xf32> to vector<8x128xf32>
    %275 = arith.mulf %273, %274 : vector<8x128xf32>
    %276 = vector.broadcast %14 : vector<1x128xf32> to vector<8x128xf32>
    %277 = arith.addf %275, %276 : vector<8x128xf32>
    %278 = vector.extract_strided_slice %277 {offsets = [0, 0], sizes = [8, 32], strides = [1, 1]} : vector<8x128xf32> to vector<8x32xf32>
    %279 = vector.extract_strided_slice %277 {offsets = [0, 32], sizes = [8, 32], strides = [1, 1]} : vector<8x128xf32> to vector<8x32xf32>
    %280 = vector.extract_strided_slice %277 {offsets = [0, 64], sizes = [8, 32], strides = [1, 1]} : vector<8x128xf32> to vector<8x32xf32>
    %281 = vector.extract_strided_slice %277 {offsets = [0, 96], sizes = [8, 32], strides = [1, 1]} : vector<8x128xf32> to vector<8x32xf32>
    %282 = arith.mulf %279, %249 : vector<8x32xf32>
    %283 = arith.mulf %278, %280 : vector<8x32xf32>
    %284 = arith.addf %282, %283 : vector<8x32xf32>
    %285 = math.tanh %284 : vector<8x32xf32>
    %286 = arith.mulf %281, %285 : vector<8x32xf32>
    %287 = tpu.concatenate %286, %269 in 1 : vector<8x32xf32>, vector<8x32xf32> -> vector<8x64xf32>
    %cst_34 = arith.constant dense<0.000000e+00> : vector<8x128xf32>
    %288 = tpu.matmul %287, %1, %cst_34 {dimension_numbers = #tpu.dot_dimension_numbers<[1], [0], [0], [1], [0, 0, 1, 1], [], []>} : vector<8x64xf32>, vector<64x128xf32>, vector<8x128xf32> -> vector<8x128xf32>
    %289 = vector.broadcast %2 : vector<1x128xf32> to vector<8x128xf32>
    %290 = arith.addf %288, %289 : vector<8x128xf32>
    %291 = math.tanh %290 : vector<8x128xf32>
    %292 = vector.broadcast %11 : vector<1x128xf32> to vector<8x128xf32>
    %293 = arith.mulf %291, %292 : vector<8x128xf32>
    %294 = vector.broadcast %14 : vector<1x128xf32> to vector<8x128xf32>
    %295 = arith.addf %293, %294 : vector<8x128xf32>
    %296 = vector.extract_strided_slice %295 {offsets = [0, 0], sizes = [8, 32], strides = [1, 1]} : vector<8x128xf32> to vector<8x32xf32>
    %297 = vector.extract_strided_slice %295 {offsets = [0, 32], sizes = [8, 32], strides = [1, 1]} : vector<8x128xf32> to vector<8x32xf32>
    %298 = vector.extract_strided_slice %295 {offsets = [0, 64], sizes = [8, 32], strides = [1, 1]} : vector<8x128xf32> to vector<8x32xf32>
    %299 = vector.extract_strided_slice %295 {offsets = [0, 96], sizes = [8, 32], strides = [1, 1]} : vector<8x128xf32> to vector<8x32xf32>
    %300 = arith.mulf %297, %267 : vector<8x32xf32>
    %301 = arith.mulf %296, %298 : vector<8x32xf32>
    %302 = arith.addf %300, %301 : vector<8x32xf32>
    %303 = math.tanh %302 : vector<8x32xf32>
    %304 = arith.mulf %299, %303 : vector<8x32xf32>
    %305 = tpu.concatenate %286, %304 in 0 : vector<8x32xf32>, vector<8x32xf32> -> vector<16x32xf32>
    %c0_35 = arith.constant 0 : index
    %c0_36 = arith.constant 0 : index
    %306 = vector.load %arg6[%c0_35, %c0_36] : memref<32x128xf32, #tpu.memory_space<vmem>>, vector<32x128xf32>
    %cst_37 = arith.constant dense<0.000000e+00> : vector<16x128xf32>
    %307 = tpu.matmul %305, %306, %cst_37 {dimension_numbers = #tpu.dot_dimension_numbers<[1], [0], [0], [1], [0, 0, 1, 1], [], []>} : vector<16x32xf32>, vector<32x128xf32>, vector<16x128xf32> -> vector<16x128xf32>
    %c0_38 = arith.constant 0 : index
    %c0_39 = arith.constant 0 : index
    %308 = vector.load %arg7[%c0_38, %c0_39] : memref<1x128xf32, #tpu.memory_space<vmem>>, vector<1x128xf32>
    %309 = vector.broadcast %308 : vector<1x128xf32> to vector<16x128xf32>
    %310 = arith.addf %307, %309 : vector<16x128xf32>
    %cst_40 = arith.constant 0.000000e+00 : f32
    %311 = vector.broadcast %cst_40 : f32 to vector<16x128xf32>
    %312 = arith.maximumf %310, %311 : vector<16x128xf32>
    %c0_41 = arith.constant 0 : index
    %c0_42 = arith.constant 0 : index
    %313 = vector.load %arg8[%c0_41, %c0_42] : memref<1x128xf32, #tpu.memory_space<vmem>>, vector<1x128xf32>
    %314 = vector.broadcast %313 : vector<1x128xf32> to vector<16x128xf32>
    %315 = arith.mulf %312, %314 : vector<16x128xf32>
    %cst_43 = arith.constant dense<0.000000e+00> : vector<16xf32>
    %316 = vector.multi_reduction <add>, %315, %cst_43 [1] : vector<16x128xf32> to vector<16xf32>
    %317 = vector.shape_cast %316 : vector<16xf32> to vector<16x1xf32>
    %c0_44 = arith.constant 0 : index
    %c0_45 = arith.constant 0 : index
    %318 = vector.load %arg9[%c0_44, %c0_45] : memref<1x1xf32, #tpu.memory_space<vmem>>, vector<1x1xf32>
    %319 = vector.broadcast %318 : vector<1x1xf32> to vector<16x1xf32>
    %320 = arith.addf %317, %319 : vector<16x1xf32>
    %c0_46 = arith.constant 0 : index
    %c0_47 = arith.constant 0 : index
    %321 = vector.load %arg10[%c0_46, %c0_47] : memref<16x1xf32, #tpu.memory_space<vmem>>, vector<16x1xf32>
    tpu.vector_store %arg10[%c0_46, %c0_47], %320 {strides = array<i32>} : memref<16x1xf32, #tpu.memory_space<vmem>>, vector<16x1xf32>,
    return
  }
}

</mosaic_0001>

<llo_original>
// kernel: lstm_net_forward.1
$region0: #{lstm_net_forward.1}
  #allocation0 [shape = 'u32[]', space=smem, size = 0x4, offset = 0x4, fixed_abs, tag = 'smem constant byte address 0x4 - core index']
  #allocation1 [shape = 'u32[72,128]{1,0:T(1,128)}', space=vmem, size = 0x9000, scoped, tag = 'internal scratch']
  #allocation2 [shape = 'f32[1,1]{1,0:T(1,128)S(1)}', space=vmem, size = 0x200, scoped, tag = 'scoped memory for lstm_net_forward.1']
  %s0 = inlined_call_operand.vmem [shape: f32[64,16], index: 0, kind: input, shape index: {}]
  %s1 = inlined_call_operand.vmem [shape: f32[16,128], index: 1, kind: input, shape index: {}]
  %s2 = inlined_call_operand.vmem [shape: f32[32,128], index: 2, kind: input, shape index: {}]
  %s3 = inlined_call_operand.vmem [shape: f32[1,128], index: 3, kind: input, shape index: {}]
  %s4 = inlined_call_operand.vmem [shape: f32[64,128], index: 4, kind: input, shape index: {}]
  %s5 = inlined_call_operand.vmem [shape: f32[1,128], index: 5, kind: input, shape index: {}]
  %s6 = inlined_call_operand.hbm [shape: f32[32,128], index: 6, kind: input, shape index: {}]
  %s7 = inlined_call_operand.vmem [shape: f32[1,128], index: 7, kind: input, shape index: {}]
  %s8 = inlined_call_operand.vmem [shape: f32[1,128], index: 8, kind: input, shape index: {}]
  %s9 = inlined_call_operand.<no memory space> [shape: f32[1,1], index: 9, kind: input, shape index: {}]
  %s10 = inlined_call_operand.vmem [shape: f32[16,1], index: 10, kind: output, shape index: {}]
  %s11 = sld [smem:[#allocation0]]
  $region54: #{lstm_net_forward.1} parent=0
    _
  %s13 = ssub.s32 1, %s11
  %s14 = scalar_select 0, %s13, %s11
  %v15 = vstv %s9
  %16 = vst [vmem:[#allocation2] sm:$0x1] %v15
  $region1: #{lstm_net_forward.1} parent=0
    #allocation3 [shape = 'u8[16384]{0}', space=vmem, size = 0x4000, scoped, tag = 'input window, operand 6, single buffered']
    #allocation4 [shape = 's32[1]{0}', space=sflag, size = 0x4, scoped, tag = 'scoped memory for lstm_net_forward.1']
    %17 = vsyncpa [#allocation4], 0
    // Predicated region
    $region2: #{lstm_net_forward.1} parent=1 // pred_check
      _
    $region3: #{lstm_net_forward.1} parent=1 // pred_check_branch
      %19 = sbr.rel (0) target = $region5
    $region4: #{lstm_net_forward.1} parent=1 // pred_region
      _
    $region5: #{lstm_net_forward.1} parent=1 // pred_fallthru
      _
    // Predicated region
    $region6: #{lstm_net_forward.1} parent=1 // pred_check
      _
    $region7: #{lstm_net_forward.1} parent=1 // pred_check_branch
      %21 = sbr.rel (0) target = $region9
    $region8: #{lstm_net_forward.1} parent=1 // pred_region
      _
    $region9: #{lstm_net_forward.1} parent=1 // pred_fallthru
      _
    // Predicated region
    $region10: #{lstm_net_forward.1} parent=1 // pred_check
      _
    $region11: #{lstm_net_forward.1} parent=1 // pred_check_branch
      %23 = sbr.rel (0) target = $region13
    $region12: #{lstm_net_forward.1} parent=1 // pred_region
      _
    $region13: #{lstm_net_forward.1} parent=1 // pred_fallthru
      _
    // Predicated region
    $region14: #{lstm_net_forward.1} parent=1 // pred_check
      _
    $region15: #{lstm_net_forward.1} parent=1 // pred_check_branch
      %25 = sbr.rel (0) target = $region17
    $region16: #{lstm_net_forward.1} parent=1 // pred_region
      _
    $region17: #{lstm_net_forward.1} parent=1 // pred_fallthru
      _
    // Predicated region
    $region18: #{lstm_net_forward.1} parent=1 // pred_check
      _
    $region19: #{lstm_net_forward.1} parent=1 // pred_check_branch
      %27 = sbr.rel (0) target = $region21
    $region20: #{lstm_net_forward.1} parent=1 // pred_region
      _
    $region21: #{lstm_net_forward.1} parent=1 // pred_fallthru
      _
    // Predicated region
    $region22: #{lstm_net_forward.1} parent=1 // pred_check
      _
    $region23: #{lstm_net_forward.1} parent=1 // pred_check_branch
      %29 = sbr.rel (0) target = $region25
    $region24: #{lstm_net_forward.1} parent=1 // pred_region
      _
    $region25: #{lstm_net_forward.1} parent=1 // pred_fallthru
      _
    // Predicated region
    $region26: #{lstm_net_forward.1} parent=1 // pred_check
      _
    $region27: #{lstm_net_forward.1} parent=1 // pred_check_branch
      %31 = sbr.rel (0) target = $region29
    $region28: #{lstm_net_forward.1} parent=1 // pred_region
      %33 = vsyncadd [#allocation4], 0
      %s34 = sshll.u32 %s6, 4
      %s35 = int_to_ptr.hbm [resolvable:$true] %s34
      %s36 = sshll.u32 [#allocation3], 4
      %s37 = int_to_ptr.vmem [resolvable:$true] %s36
      %42 = dma.hbm_to_vmem [thread:$0]  %s35, 512, %s37, [#allocation4], 128, 128, 8
    $region29: #{lstm_net_forward.1} parent=1 // pred_fallthru
      _
    // Predicated region
    $region30: #{lstm_net_forward.1} parent=1 // pred_check
      _
    $region31: #{lstm_net_forward.1} parent=1 // pred_check_branch
      %44 = sbr.rel (0) target = $region33
    $region32: #{lstm_net_forward.1} parent=1 // pred_region
      _
    $region33: #{lstm_net_forward.1} parent=1 // pred_fallthru
      _
    // Predicated region
    $region34: #{lstm_net_forward.1} parent=1 // pred_check
      _
    $region35: #{lstm_net_forward.1} parent=1 // pred_check_branch
      %46 = sbr.rel (0) target = $region37
    $region36: #{lstm_net_forward.1} parent=1 // pred_region
      _
    $region37: #{lstm_net_forward.1} parent=1 // pred_fallthru
      _
    // Predicated region
    $region38: #{lstm_net_forward.1} parent=1 // pred_check
      _
    $region39: #{lstm_net_forward.1} parent=1 // pred_check_branch
      %48 = sbr.rel (0) target = $region41
    $region40: #{lstm_net_forward.1} parent=1 // pred_region
      _
    $region41: #{lstm_net_forward.1} parent=1 // pred_fallthru
      _
    // Predicated region
    $region42: #{lstm_net_forward.1} parent=1 // pred_check
      _
    $region43: #{lstm_net_forward.1} parent=1 // pred_check_branch
      %50 = sbr.rel (0) target = $region45
    $region44: #{lstm_net_forward.1} parent=1 // pred_region
      %52 = dma.done [#allocation4], 512
    $region45: #{lstm_net_forward.1} parent=1 // pred_fallthru
      _
    %v53 = vld [vmem:[%s2] sm:$0xff]
    %v54 = vld [vmem:[%s2 + $0x8] sm:$0xff]
    %v55 = vld [vmem:[%s2 + $0x10] sm:$0xff]
    %v56 = vld [vmem:[%s2 + $0x18] sm:$0xff]
    %v57 = vld [vmem:[%s4] sm:$0xff]
    %v58 = vld [vmem:[%s4 + $0x8] sm:$0xff]
    %v59 = vld [vmem:[%s4 + $0x10] sm:$0xff]
    %v60 = vld [vmem:[%s4 + $0x18] sm:$0xff]
    %v61 = vld [vmem:[%s4 + $0x20] sm:$0xff]
    %v62 = vld [vmem:[%s4 + $0x28] sm:$0xff]
    %v63 = vld [vmem:[%s4 + $0x30] sm:$0xff]
    %v64 = vld [vmem:[%s4 + $0x38] sm:$0xff]
    %v65 = vld [vmem:[%s5] sm:$0x1]
    %v66 = vlaneseq
    %v67 = vand.u32 %v66, 127
    %vm68 = vcmp.ge.s32.totalorder %v67, 64
    %vm69 = vcmp.lt.s32.totalorder %v67, 96
    %vm70 = vmand %vm68, %vm69
    %v71 = vsel %vm70, 1.0, 0.5
    %v72 = vsel %vm70, 0.0, 0.5
    %v73 = vld [vmem:[%s0] sm:$0xff]
    %v74 = vld [vmem:[%s0 + $0x8] sm:$0xff]
    %v75 = vld [vmem:[%s0 + $0x10] sm:$0xff]
    %v76 = vld [vmem:[%s0 + $0x18] sm:$0xff]
    %v77 = vld [vmem:[%s0 + $0x20] sm:$0xff]
    %v78 = vld [vmem:[%s0 + $0x28] sm:$0xff]
    %v79 = vld [vmem:[%s0 + $0x30] sm:$0xff]
    %v80 = vld [vmem:[%s0 + $0x38] sm:$0xff]
    %v81 = vld [vmem:[%s1] sm:$0xff]
    %v82 = vld [vmem:[%s1 + $0x8] sm:$0xff]
    %v83 = vld [vmem:[%s3] sm:$0x1]
    %v85 = vperm.slane %v83, 0
    %vm87 = vcmask 130048
    %v89 = vsel %vm87, %v73, 0
    %v92 = vsel %vm87, %v74, 0
    %v95 = vsel %vm87, %v75, 0
    %v98 = vsel %vm87, %v76, 0
    %v101 = vsel %vm87, %v77, 0
    %v104 = vsel %vm87, %v78, 0
    %v107 = vsel %vm87, %v79, 0
    %v110 = vsel %vm87, %v80, 0
    %112 = vmatpush.msra.mxu0 0.0
    %113 = vmatpush.msra.mxu0 0.0
    %114 = vmatpush.msra.mxu0 0.0
    %115 = vmatpush.msra.mxu0 0.0
    %116 = vmatpush.msra.mxu0 0.0
    %117 = vmatpush.msra.mxu0 0.0
    %118 = vmatpush.msra.mxu0 0.0
    %119 = vmatpush.msra.mxu0 0.0
    %120 = vmatpush.msra.mxu0 0.0
    %121 = vmatpush.msra.mxu0 0.0
    %122 = vmatpush.msra.mxu0 0.0
    %123 = vmatpush.msra.mxu0 0.0
    %124 = vmatpush.msra.mxu0 0.0
    %125 = vmatpush.msra.mxu0 0.0
    %126 = vmatpush.msra.mxu0 %v82
    %127 = vmatpush.msra.mxu0 %v81
    %128 = vmatmul.f32.gmra.mxu0 %v89
    %v129 = vpop.f32.mrf.mxu0
    %v130 = vadd.f32 %v85, %v129
    %131 = vmatmul.f32.gmra.mxu0 %v92
    %v132 = vpop.f32.mrf.mxu0
    %v133 = vadd.f32 %v85, %v132
    %134 = vmatmul.f32.gmra.mxu0 %v95
    %v135 = vpop.f32.mrf.mxu0
    %v136 = vadd.f32 %v85, %v135
    %137 = vmatmul.f32.gmra.mxu0 %v98
    %v138 = vpop.f32.mrf.mxu0
    %v139 = vadd.f32 %v85, %v138
    %140 = vmatmul.f32.gmra.mxu0 %v101
    %v141 = vpop.f32.mrf.mxu0
    %v142 = vadd.f32 %v85, %v141
    %143 = vmatmul.f32.gmra.mxu0 %v104
    %v144 = vpop.f32.mrf.mxu0
    %v145 = vadd.f32 %v85, %v144
    %146 = vmatmul.f32.gmra.mxu0 %v107
    %v147 = vpop.f32.mrf.mxu0
    %v148 = vadd.f32 %v85, %v147
    %149 = vmatmul.f32.gmra.mxu0 %v110
    %v150 = vpop.f32.mrf.mxu0
    %v151 = vadd.f32 %v85, %v150
    %152 = vdwg.mxu0
    %vm153 = vcmask 261120
    %v155 = vsel %vm153, 0.0, 0
    %157 = vmatpush.msra.mxu0 0.0
    %158 = vmatpush.msra.mxu0 0.0
    %159 = vmatpush.msra.mxu0 0.0
    %160 = vmatpush.msra.mxu0 0.0
    %161 = vmatpush.msra.mxu0 0.0
    %162 = vmatpush.msra.mxu0 0.0
    %163 = vmatpush.msra.mxu0 0.0
    %164 = vmatpush.msra.mxu0 0.0
    %165 = vmatpush.msra.mxu0 0.0
    %166 = vmatpush.msra.mxu0 0.0
    %167 = vmatpush.msra.mxu0 0.0
    %168 = vmatpush.msra.mxu0 0.0
    %169 = vmatpush.msra.mxu0 %v56
    %170 = vmatpush.msra.mxu0 %v55
    %171 = vmatpush.msra.mxu0 %v54
    %172 = vmatpush.msra.mxu0 %v53
    %173 = vmatmul.f32.gmra.mxu0 %v155
    %v174 = vpop.f32.mrf.mxu0
    %v175 = vadd.f32 0.0, %v174
    %176 = vdwg.mxu0
    %v177 = vadd.f32 %v130, %v175
    %v178 = vtanh.pop %v177
    %v179 = vmul.f32 %v178, %v71
    %v180 = vadd.f32 %v179, %v72
    %v181 = vmul.f32 %v180, 0.0
    %183 = vrot.lane.b32.xlu0 %v180, 64
    %v184 = vpop.permute.xlu0 %183
    %v186 = vmul.f32 %v180, %v184
    %188 = vrot.lane.b32.xlu0 %v186, 32
    %v189 = vpop.permute.xlu0 %188
    %v191 = vadd.f32 %v181, %v189
    %v192 = vtanh.pop %v191
    %194 = vrot.lane.b32.xlu0 %v192, 64
    %v195 = vpop.permute.xlu0 %194
    %v197 = vmul.f32 %v180, %v195
    %199 = vrot.lane.b32.xlu0 %v197, 32
    %v200 = vpop.permute.xlu0 %199
    %v202 = vsel %vm153, %v200, 0.0
    %v204 = vperm.slane %v65, 0
    %vm206 = vcmask 523264
    %v208 = vsel %vm206, %v202, 0
    %210 = vmatpush.msra.mxu0 0.0
    %211 = vmatpush.msra.mxu0 0.0
    %212 = vmatpush.msra.mxu0 0.0
    %213 = vmatpush.msra.mxu0 0.0
    %214 = vmatpush.msra.mxu0 0.0
    %215 = vmatpush.msra.mxu0 0.0
    %216 = vmatpush.msra.mxu0 0.0
    %217 = vmatpush.msra.mxu0 0.0
    %218 = vmatpush.msra.mxu0 %v64
    %219 = vmatpush.msra.mxu0 %v63
    %220 = vmatpush.msra.mxu0 %v62
    %221 = vmatpush.msra.mxu0 %v61
    %222 = vmatpush.msra.mxu0 %v60
    %223 = vmatpush.msra.mxu0 %v59
    %224 = vmatpush.msra.mxu0 %v58
    %225 = vmatpush.msra.mxu0 %v57
    %226 = vmatmul.f32.gmra.mxu0 %v208
    %v227 = vpop.f32.mrf.mxu0
    %v228 = vadd.f32 %v204, %v227
    %229 = vdwg.mxu0
    %v230 = vtanh.pop %v228
    %v231 = vmul.f32 %v230, %v71
    %v232 = vadd.f32 %v231, %v72
    %v233 = vmul.f32 %v232, 0.0
    %235 = vrot.lane.b32.xlu0 %v232, 64
    %v236 = vpop.permute.xlu0 %235
    %v238 = vmul.f32 %v232, %v236
    %240 = vrot.lane.b32.xlu0 %v238, 32
    %v241 = vpop.permute.xlu0 %240
    %v243 = vadd.f32 %v233, %v241
    %v244 = vtanh.pop %v243
    %246 = vrot.lane.b32.xlu0 %v244, 64
    %v247 = vpop.permute.xlu0 %246
    %v249 = vmul.f32 %v232, %v247
    %v250 = vsel %vm153, %v200, 0
    %252 = vmatpush.msra.mxu0 0.0
    %253 = vmatpush.msra.mxu0 0.0
    %254 = vmatpush.msra.mxu0 0.0
    %255 = vmatpush.msra.mxu0 0.0
    %256 = vmatpush.msra.mxu0 0.0
    %257 = vmatpush.msra.mxu0 0.0
    %258 = vmatpush.msra.mxu0 0.0
    %259 = vmatpush.msra.mxu0 0.0
    %260 = vmatpush.msra.mxu0 0.0
    %261 = vmatpush.msra.mxu0 0.0
    %262 = vmatpush.msra.mxu0 0.0
    %263 = vmatpush.msra.mxu0 0.0
    %264 = vmatpush.msra.mxu0 %v56
    %265 = vmatpush.msra.mxu0 %v55
    %266 = vmatpush.msra.mxu0 %v54
    %267 = vmatpush.msra.mxu0 %v53
    %268 = vmatmul.f32.gmra.mxu0 %v250
    %v269 = vpop.f32.mrf.mxu0
    %v270 = vadd.f32 0.0, %v269
    %271 = vdwg.mxu0
    %v272 = vadd.f32 %v133, %v270
    %v273 = vtanh.pop %v272
    %v274 = vmul.f32 %v273, %v71
    %v275 = vadd.f32 %v274, %v72
    %v276 = vmul.f32 %v275, %v191
    %278 = vrot.lane.b32.xlu0 %v275, 64
    %v279 = vpop.permute.xlu0 %278
    %v281 = vmul.f32 %v275, %v279
    %283 = vrot.lane.b32.xlu0 %v281, 32
    %v284 = vpop.permute.xlu0 %283
    %v286 = vadd.f32 %v276, %v284
    %v287 = vtanh.pop %v286
    %289 = vrot.lane.b32.xlu0 %v287, 64
    %v290 = vpop.permute.xlu0 %289
    %v292 = vmul.f32 %v275, %v290
    %294 = vrot.lane.b32.xlu0 %v292, 32
    %v295 = vpop.permute.xlu0 %294
    %298 = vrot.lane.b32.xlu0 %v249, 64
    %v299 = vpop.permute.xlu0 %298
    %v301 = vsel %vm153, %v295, %v299
    %v303 = vsel %vm206, %v301, 0
    %305 = vmatpush.msra.mxu0 0.0
    %306 = vmatpush.msra.mxu0 0.0
    %307 = vmatpush.msra.mxu0 0.0
    %308 = vmatpush.msra.mxu0 0.0
    %309 = vmatpush.msra.mxu0 0.0
    %310 = vmatpush.msra.mxu0 0.0
    %311 = vmatpush.msra.mxu0 0.0
    %312 = vmatpush.msra.mxu0 0.0
    %313 = vmatpush.msra.mxu0 %v64
    %314 = vmatpush.msra.mxu0 %v63
    %315 = vmatpush.msra.mxu0 %v62
    %316 = vmatpush.msra.mxu0 %v61
    %317 = vmatpush.msra.mxu0 %v60
    %318 = vmatpush.msra.mxu0 %v59
    %319 = vmatpush.msra.mxu0 %v58
    %320 = vmatpush.msra.mxu0 %v57
    %321 = vmatmul.f32.gmra.mxu0 %v303
    %v322 = vpop.f32.mrf.mxu0
    %v323 = vadd.f32 %v204, %v322
    %324 = vdwg.mxu0
    %v325 = vtanh.pop %v323
    %v326 = vmul.f32 %v325, %v71
    %v327 = vadd.f32 %v326, %v72
    %v328 = vmul.f32 %v327, %v243
    %330 = vrot.lane.b32.xlu0 %v327, 64
    %v331 = vpop.permute.xlu0 %330
    %v333 = vmul.f32 %v327, %v331
    %335 = vrot.lane.b32.xlu0 %v333, 32
    %v336 = vpop.permute.xlu0 %335
    %v338 = vadd.f32 %v328, %v336
    %v339 = vtanh.pop %v338
    %341 = vrot.lane.b32.xlu0 %v339, 64
    %v342 = vpop.permute.xlu0 %341
    %v344 = vmul.f32 %v327, %v342
    %v345 = vsel %vm153, %v295, 0
    %347 = vmatpush.msra.mxu0 0.0
    %348 = vmatpush.msra.mxu0 0.0
    %349 = vmatpush.msra.mxu0 0.0
    %350 = vmatpush.msra.mxu0 0.0
    %351 = vmatpush.msra.mxu0 0.0
    %352 = vmatpush.msra.mxu0 0.0
    %353 = vmatpush.msra.mxu0 0.0
    %354 = vmatpush.msra.mxu0 0.0
    %355 = vmatpush.msra.mxu0 0.0
    %356 = vmatpush.msra.mxu0 0.0
    %357 = vmatpush.msra.mxu0 0.0
    %358 = vmatpush.msra.mxu0 0.0
    %359 = vmatpush.msra.mxu0 %v56
    %360 = vmatpush.msra.mxu0 %v55
    %361 = vmatpush.msra.mxu0 %v54
    %362 = vmatpush.msra.mxu0 %v53
    %363 = vmatmul.f32.gmra.mxu0 %v345
    %v364 = vpop.f32.mrf.mxu0
    %v365 = vadd.f32 0.0, %v364
    %366 = vdwg.mxu0
    %v367 = vadd.f32 %v136, %v365
    %v368 = vtanh.pop %v367
    %v369 = vmul.f32 %v368, %v71
    %v370 = vadd.f32 %v369, %v72
    %v371 = vmul.f32 %v370, %v286
    %373 = vrot.lane.b32.xlu0 %v370, 64
    %v374 = vpop.permute.xlu0 %373
    %v376 = vmul.f32 %v370, %v374
    %378 = vrot.lane.b32.xlu0 %v376, 32
    %v379 = vpop.permute.xlu0 %378
    %v381 = vadd.f32 %v371, %v379
    %v382 = vtanh.pop %v381
    %384 = vrot.lane.b32.xlu0 %v382, 64
    %v385 = vpop.permute.xlu0 %384
    %v387 = vmul.f32 %v370, %v385
    %389 = vrot.lane.b32.xlu0 %v387, 32
    %v390 = vpop.permute.xlu0 %389
    %393 = vrot.lane.b32.xlu0 %v344, 64
    %v394 = vpop.permute.xlu0 %393
    %v396 = vsel %vm153, %v390, %v394
    %v398 = vsel %vm206, %v396, 0
    %400 = vmatpush.msra.mxu0 0.0
    %401 = vmatpush.msra.mxu0 0.0
    %402 = vmatpush.msra.mxu0 0.0
    %403 = vmatpush.msra.mxu0 0.0
    %404 = vmatpush.msra.mxu0 0.0
    %405 = vmatpush.msra.mxu0 0.0
    %406 = vmatpush.msra.mxu0 0.0
    %407 = vmatpush.msra.mxu0 0.0
    %408 = vmatpush.msra.mxu0 %v64
    %409 = vmatpush.msra.mxu0 %v63
    %410 = vmatpush.msra.mxu0 %v62
    %411 = vmatpush.msra.mxu0 %v61
    %412 = vmatpush.msra.mxu0 %v60
    %413 = vmatpush.msra.mxu0 %v59
    %414 = vmatpush.msra.mxu0 %v58
    %415 = vmatpush.msra.mxu0 %v57
    %416 = vmatmul.f32.gmra.mxu0 %v398
    %v417 = vpop.f32.mrf.mxu0
    %v418 = vadd.f32 %v204, %v417
    %419 = vdwg.mxu0
    %v420 = vtanh.pop %v418
    %v421 = vmul.f32 %v420, %v71
    %v422 = vadd.f32 %v421, %v72
    %v423 = vmul.f32 %v422, %v338
    %425 = vrot.lane.b32.xlu0 %v422, 64
    %v426 = vpop.permute.xlu0 %425
    %v428 = vmul.f32 %v422, %v426
    %430 = vrot.lane.b32.xlu0 %v428, 32
    %v431 = vpop.permute.xlu0 %430
    %v433 = vadd.f32 %v423, %v431
    %v434 = vtanh.pop %v433
    %436 = vrot.lane.b32.xlu0 %v434, 64
    %v437 = vpop.permute.xlu0 %436
    %v439 = vmul.f32 %v422, %v437
    %v440 = vsel %vm153, %v390, 0
    %442 = vmatpush.msra.mxu0 0.0
    %443 = vmatpush.msra.mxu0 0.0
    %444 = vmatpush.msra.mxu0 0.0
    %445 = vmatpush.msra.mxu0 0.0
    %446 = vmatpush.msra.mxu0 0.0
    %447 = vmatpush.msra.mxu0 0.0
    %448 = vmatpush.msra.mxu0 0.0
    %449 = vmatpush.msra.mxu0 0.0
    %450 = vmatpush.msra.mxu0 0.0
    %451 = vmatpush.msra.mxu0 0.0
    %452 = vmatpush.msra.mxu0 0.0
    %453 = vmatpush.msra.mxu0 0.0
    %454 = vmatpush.msra.mxu0 %v56
    %455 = vmatpush.msra.mxu0 %v55
    %456 = vmatpush.msra.mxu0 %v54
    %457 = vmatpush.msra.mxu0 %v53
    %458 = vmatmul.f32.gmra.mxu0 %v440
    %v459 = vpop.f32.mrf.mxu0
    %v460 = vadd.f32 0.0, %v459
    %461 = vdwg.mxu0
    %v462 = vadd.f32 %v139, %v460
    %v463 = vtanh.pop %v462
    %v464 = vmul.f32 %v463, %v71
    %v465 = vadd.f32 %v464, %v72
    %v466 = vmul.f32 %v465, %v381
    %468 = vrot.lane.b32.xlu0 %v465, 64
    %v469 = vpop.permute.xlu0 %468
    %v471 = vmul.f32 %v465, %v469
    %473 = vrot.lane.b32.xlu0 %v471, 32
    %v474 = vpop.permute.xlu0 %473
    %v476 = vadd.f32 %v466, %v474
    %v477 = vtanh.pop %v476
    %479 = vrot.lane.b32.xlu0 %v477, 64
    %v480 = vpop.permute.xlu0 %479
    %v482 = vmul.f32 %v465, %v480
    %484 = vrot.lane.b32.xlu0 %v482, 32
    %v485 = vpop.permute.xlu0 %484
    %488 = vrot.lane.b32.xlu0 %v439, 64
    %v489 = vpop.permute.xlu0 %488
    %v491 = vsel %vm153, %v485, %v489
    %v493 = vsel %vm206, %v491, 0
    %495 = vmatpush.msra.mxu0 0.0
    %496 = vmatpush.msra.mxu0 0.0
    %497 = vmatpush.msra.mxu0 0.0
    %498 = vmatpush.msra.mxu0 0.0
    %499 = vmatpush.msra.mxu0 0.0
    %500 = vmatpush.msra.mxu0 0.0
    %501 = vmatpush.msra.mxu0 0.0
    %502 = vmatpush.msra.mxu0 0.0
    %503 = vmatpush.msra.mxu0 %v64
    %504 = vmatpush.msra.mxu0 %v63
    %505 = vmatpush.msra.mxu0 %v62
    %506 = vmatpush.msra.mxu0 %v61
    %507 = vmatpush.msra.mxu0 %v60
    %508 = vmatpush.msra.mxu0 %v59
    %509 = vmatpush.msra.mxu0 %v58
    %510 = vmatpush.msra.mxu0 %v57
    %511 = vmatmul.f32.gmra.mxu0 %v493
    %v512 = vpop.f32.mrf.mxu0
    %v513 = vadd.f32 %v204, %v512
    %514 = vdwg.mxu0
    %v515 = vtanh.pop %v513
    %v516 = vmul.f32 %v515, %v71
    %v517 = vadd.f32 %v516, %v72
    %v518 = vmul.f32 %v517, %v433
    %520 = vrot.lane.b32.xlu0 %v517, 64
    %v521 = vpop.permute.xlu0 %520
    %v523 = vmul.f32 %v517, %v521
    %525 = vrot.lane.b32.xlu0 %v523, 32
    %v526 = vpop.permute.xlu0 %525
    %v528 = vadd.f32 %v518, %v526
    %v529 = vtanh.pop %v528
    %531 = vrot.lane.b32.xlu0 %v529, 64
    %v532 = vpop.permute.xlu0 %531
    %v534 = vmul.f32 %v517, %v532
    %v535 = vsel %vm153, %v485, 0
    %537 = vmatpush.msra.mxu0 0.0
    %538 = vmatpush.msra.mxu0 0.0
    %539 = vmatpush.msra.mxu0 0.0
    %540 = vmatpush.msra.mxu0 0.0
    %541 = vmatpush.msra.mxu0 0.0
    %542 = vmatpush.msra.mxu0 0.0
    %543 = vmatpush.msra.mxu0 0.0
    %544 = vmatpush.msra.mxu0 0.0
    %545 = vmatpush.msra.mxu0 0.0
    %546 = vmatpush.msra.mxu0 0.0
    %547 = vmatpush.msra.mxu0 0.0
    %548 = vmatpush.msra.mxu0 0.0
    %549 = vmatpush.msra.mxu0 %v56
    %550 = vmatpush.msra.mxu0 %v55
    %551 = vmatpush.msra.mxu0 %v54
    %552 = vmatpush.msra.mxu0 %v53
    %553 = vmatmul.f32.gmra.mxu0 %v535
    %v554 = vpop.f32.mrf.mxu0
    %v555 = vadd.f32 0.0, %v554
    %556 = vdwg.mxu0
    %v557 = vadd.f32 %v142, %v555
    %v558 = vtanh.pop %v557
    %v559 = vmul.f32 %v558, %v71
    %v560 = vadd.f32 %v559, %v72
    %v561 = vmul.f32 %v560, %v476
    %563 = vrot.lane.b32.xlu0 %v560, 64
    %v564 = vpop.permute.xlu0 %563
    %v566 = vmul.f32 %v560, %v564
    %568 = vrot.lane.b32.xlu0 %v566, 32
    %v569 = vpop.permute.xlu0 %568
    %v571 = vadd.f32 %v561, %v569
    %v572 = vtanh.pop %v571
    %574 = vrot.lane.b32.xlu0 %v572, 64
    %v575 = vpop.permute.xlu0 %574
    %v577 = vmul.f32 %v560, %v575
    %579 = vrot.lane.b32.xlu0 %v577, 32
    %v580 = vpop.permute.xlu0 %579
    %583 = vrot.lane.b32.xlu0 %v534, 64
    %v584 = vpop.permute.xlu0 %583
    %v586 = vsel %vm153, %v580, %v584
    %v588 = vsel %vm206, %v586, 0
    %590 = vmatpush.msra.mxu0 0.0
    %591 = vmatpush.msra.mxu0 0.0
    %592 = vmatpush.msra.mxu0 0.0
    %593 = vmatpush.msra.mxu0 0.0
    %594 = vmatpush.msra.mxu0 0.0
    %595 = vmatpush.msra.mxu0 0.0
    %596 = vmatpush.msra.mxu0 0.0
    %597 = vmatpush.msra.mxu0 0.0
    %598 = vmatpush.msra.mxu0 %v64
    %599 = vmatpush.msra.mxu0 %v63
    %600 = vmatpush.msra.mxu0 %v62
    %601 = vmatpush.msra.mxu0 %v61
    %602 = vmatpush.msra.mxu0 %v60
    %603 = vmatpush.msra.mxu0 %v59
    %604 = vmatpush.msra.mxu0 %v58
    %605 = vmatpush.msra.mxu0 %v57
    %606 = vmatmul.f32.gmra.mxu0 %v588
    %v607 = vpop.f32.mrf.mxu0
    %v608 = vadd.f32 %v204, %v607
    %609 = vdwg.mxu0
    %v610 = vtanh.pop %v608
    %v611 = vmul.f32 %v610, %v71
    %v612 = vadd.f32 %v611, %v72
    %v613 = vmul.f32 %v612, %v528
    %615 = vrot.lane.b32.xlu0 %v612, 64
    %v616 = vpop.permute.xlu0 %615
    %v618 = vmul.f32 %v612, %v616
    %620 = vrot.lane.b32.xlu0 %v618, 32
    %v621 = vpop.permute.xlu0 %620
    %v623 = vadd.f32 %v613, %v621
    %v624 = vtanh.pop %v623
    %626 = vrot.lane.b32.xlu0 %v624, 64
    %v627 = vpop.permute.xlu0 %626
    %v629 = vmul.f32 %v612, %v627
    %v630 = vsel %vm153, %v580, 0
    %632 = vmatpush.msra.mxu0 0.0
    %633 = vmatpush.msra.mxu0 0.0
    %634 = vmatpush.msra.mxu0 0.0
    %635 = vmatpush.msra.mxu0 0.0
    %636 = vmatpush.msra.mxu0 0.0
    %637 = vmatpush.msra.mxu0 0.0
    %638 = vmatpush.msra.mxu0 0.0
    %639 = vmatpush.msra.mxu0 0.0
    %640 = vmatpush.msra.mxu0 0.0
    %641 = vmatpush.msra.mxu0 0.0
    %642 = vmatpush.msra.mxu0 0.0
    %643 = vmatpush.msra.mxu0 0.0
    %644 = vmatpush.msra.mxu0 %v56
    %645 = vmatpush.msra.mxu0 %v55
    %646 = vmatpush.msra.mxu0 %v54
    %647 = vmatpush.msra.mxu0 %v53
    %648 = vmatmul.f32.gmra.mxu0 %v630
    %v649 = vpop.f32.mrf.mxu0
    %v650 = vadd.f32 0.0, %v649
    %651 = vdwg.mxu0
    %v652 = vadd.f32 %v145, %v650
    %v653 = vtanh.pop %v652
    %v654 = vmul.f32 %v653, %v71
    %v655 = vadd.f32 %v654, %v72
    %v656 = vmul.f32 %v655, %v571
    %658 = vrot.lane.b32.xlu0 %v655, 64
    %v659 = vpop.permute.xlu0 %658
    %v661 = vmul.f32 %v655, %v659
    %663 = vrot.lane.b32.xlu0 %v661, 32
    %v664 = vpop.permute.xlu0 %663
    %v666 = vadd.f32 %v656, %v664
    %v667 = vtanh.pop %v666
    %669 = vrot.lane.b32.xlu0 %v667, 64
    %v670 = vpop.permute.xlu0 %669
    %v672 = vmul.f32 %v655, %v670
    %674 = vrot.lane.b32.xlu0 %v672, 32
    %v675 = vpop.permute.xlu0 %674
    %678 = vrot.lane.b32.xlu0 %v629, 64
    %v679 = vpop.permute.xlu0 %678
    %v681 = vsel %vm153, %v675, %v679
    %v683 = vsel %vm206, %v681, 0
    %685 = vmatpush.msra.mxu0 0.0
    %686 = vmatpush.msra.mxu0 0.0
    %687 = vmatpush.msra.mxu0 0.0
    %688 = vmatpush.msra.mxu0 0.0
    %689 = vmatpush.msra.mxu0 0.0
    %690 = vmatpush.msra.mxu0 0.0
    %691 = vmatpush.msra.mxu0 0.0
    %692 = vmatpush.msra.mxu0 0.0
    %693 = vmatpush.msra.mxu0 %v64
    %694 = vmatpush.msra.mxu0 %v63
    %695 = vmatpush.msra.mxu0 %v62
    %696 = vmatpush.msra.mxu0 %v61
    %697 = vmatpush.msra.mxu0 %v60
    %698 = vmatpush.msra.mxu0 %v59
    %699 = vmatpush.msra.mxu0 %v58
    %700 = vmatpush.msra.mxu0 %v57
    %701 = vmatmul.f32.gmra.mxu0 %v683
    %v702 = vpop.f32.mrf.mxu0
    %v703 = vadd.f32 %v204, %v702
    %704 = vdwg.mxu0
    %v705 = vtanh.pop %v703
    %v706 = vmul.f32 %v705, %v71
    %v707 = vadd.f32 %v706, %v72
    %v708 = vmul.f32 %v707, %v623
    %710 = vrot.lane.b32.xlu0 %v707, 64
    %v711 = vpop.permute.xlu0 %710
    %v713 = vmul.f32 %v707, %v711
    %715 = vrot.lane.b32.xlu0 %v713, 32
    %v716 = vpop.permute.xlu0 %715
    %v718 = vadd.f32 %v708, %v716
    %v719 = vtanh.pop %v718
    %721 = vrot.lane.b32.xlu0 %v719, 64
    %v722 = vpop.permute.xlu0 %721
    %v724 = vmul.f32 %v707, %v722
    %v725 = vsel %vm153, %v675, 0
    %727 = vmatpush.msra.mxu0 0.0
    %728 = vmatpush.msra.mxu0 0.0
    %729 = vmatpush.msra.mxu0 0.0
    %730 = vmatpush.msra.mxu0 0.0
    %731 = vmatpush.msra.mxu0 0.0
    %732 = vmatpush.msra.mxu0 0.0
    %733 = vmatpush.msra.mxu0 0.0
    %734 = vmatpush.msra.mxu0 0.0
    %735 = vmatpush.msra.mxu0 0.0
    %736 = vmatpush.msra.mxu0 0.0
    %737 = vmatpush.msra.mxu0 0.0
    %738 = vmatpush.msra.mxu0 0.0
    %739 = vmatpush.msra.mxu0 %v56
    %740 = vmatpush.msra.mxu0 %v55
    %741 = vmatpush.msra.mxu0 %v54
    %742 = vmatpush.msra.mxu0 %v53
    %743 = vmatmul.f32.gmra.mxu0 %v725
    %v744 = vpop.f32.mrf.mxu0
    %v745 = vadd.f32 0.0, %v744
    %746 = vdwg.mxu0
    %v747 = vadd.f32 %v148, %v745
    %v748 = vtanh.pop %v747
    %v749 = vmul.f32 %v748, %v71
    %v750 = vadd.f32 %v749, %v72
    %v751 = vmul.f32 %v750, %v666
    %753 = vrot.lane.b32.xlu0 %v750, 64
    %v754 = vpop.permute.xlu0 %753
    %v756 = vmul.f32 %v750, %v754
    %758 = vrot.lane.b32.xlu0 %v756, 32
    %v759 = vpop.permute.xlu0 %758
    %v761 = vadd.f32 %v751, %v759
    %v762 = vtanh.pop %v761
    %764 = vrot.lane.b32.xlu0 %v762, 64
    %v765 = vpop.permute.xlu0 %764
    %v767 = vmul.f32 %v750, %v765
    %769 = vrot.lane.b32.xlu0 %v767, 32
    %v770 = vpop.permute.xlu0 %769
    %773 = vrot.lane.b32.xlu0 %v724, 64
    %v774 = vpop.permute.xlu0 %773
    %v776 = vsel %vm153, %v770, %v774
    %v778 = vsel %vm206, %v776, 0
    %780 = vmatpush.msra.mxu0 0.0
    %781 = vmatpush.msra.mxu0 0.0
    %782 = vmatpush.msra.mxu0 0.0
    %783 = vmatpush.msra.mxu0 0.0
    %784 = vmatpush.msra.mxu0 0.0
    %785 = vmatpush.msra.mxu0 0.0
    %786 = vmatpush.msra.mxu0 0.0
    %787 = vmatpush.msra.mxu0 0.0
    %788 = vmatpush.msra.mxu0 %v64
    %789 = vmatpush.msra.mxu0 %v63
    %790 = vmatpush.msra.mxu0 %v62
    %791 = vmatpush.msra.mxu0 %v61
    %792 = vmatpush.msra.mxu0 %v60
    %793 = vmatpush.msra.mxu0 %v59
    %794 = vmatpush.msra.mxu0 %v58
    %795 = vmatpush.msra.mxu0 %v57
    %796 = vmatmul.f32.gmra.mxu0 %v778
    %v797 = vpop.f32.mrf.mxu0
    %v798 = vadd.f32 %v204, %v797
    %799 = vdwg.mxu0
    %v800 = vtanh.pop %v798
    %v801 = vmul.f32 %v800, %v71
    %v802 = vadd.f32 %v801, %v72
    %v803 = vmul.f32 %v802, %v718
    %805 = vrot.lane.b32.xlu0 %v802, 64
    %v806 = vpop.permute.xlu0 %805
    %v808 = vmul.f32 %v802, %v806
    %810 = vrot.lane.b32.xlu0 %v808, 32
    %v811 = vpop.permute.xlu0 %810
    %v813 = vadd.f32 %v803, %v811
    %v814 = vtanh.pop %v813
    %816 = vrot.lane.b32.xlu0 %v814, 64
    %v817 = vpop.permute.xlu0 %816
    %v819 = vmul.f32 %v802, %v817
    %v820 = vsel %vm153, %v770, 0
    %822 = vmatpush.msra.mxu0 0.0
    %823 = vmatpush.msra.mxu0 0.0
    %824 = vmatpush.msra.mxu0 0.0
    %825 = vmatpush.msra.mxu0 0.0
    %826 = vmatpush.msra.mxu0 0.0
    %827 = vmatpush.msra.mxu0 0.0
    %828 = vmatpush.msra.mxu0 0.0
    %829 = vmatpush.msra.mxu0 0.0
    %830 = vmatpush.msra.mxu0 0.0
    %831 = vmatpush.msra.mxu0 0.0
    %832 = vmatpush.msra.mxu0 0.0
    %833 = vmatpush.msra.mxu0 0.0
    %834 = vmatpush.msra.mxu0 %v56
    %835 = vmatpush.msra.mxu0 %v55
    %836 = vmatpush.msra.mxu0 %v54
    %837 = vmatpush.msra.mxu0 %v53
    %838 = vmatmul.f32.gmra.mxu0 %v820
    %v839 = vpop.f32.mrf.mxu0
    %v840 = vadd.f32 0.0, %v839
    %841 = vdwg.mxu0
    %v842 = vadd.f32 %v151, %v840
    %v843 = vtanh.pop %v842
    %v844 = vmul.f32 %v843, %v71
    %v845 = vadd.f32 %v844, %v72
    %v846 = vmul.f32 %v845, %v761
    %848 = vrot.lane.b32.xlu0 %v845, 64
    %v849 = vpop.permute.xlu0 %848
    %v851 = vmul.f32 %v845, %v849
    %853 = vrot.lane.b32.xlu0 %v851, 32
    %v854 = vpop.permute.xlu0 %853
    %v856 = vadd.f32 %v846, %v854
    %v857 = vtanh.pop %v856
    %859 = vrot.lane.b32.xlu0 %v857, 64
    %v860 = vpop.permute.xlu0 %859
    %v862 = vmul.f32 %v845, %v860
    %864 = vrot.lane.b32.xlu0 %v862, 32
    %v865 = vpop.permute.xlu0 %864
    %868 = vrot.lane.b32.xlu0 %v819, 64
    %v869 = vpop.permute.xlu0 %868
    %v871 = vsel %vm153, %v865, %v869
    %v873 = vsel %vm206, %v871, 0
    %875 = vmatpush.msra.mxu0 0.0
    %876 = vmatpush.msra.mxu0 0.0
    %877 = vmatpush.msra.mxu0 0.0
    %878 = vmatpush.msra.mxu0 0.0
    %879 = vmatpush.msra.mxu0 0.0
    %880 = vmatpush.msra.mxu0 0.0
    %881 = vmatpush.msra.mxu0 0.0
    %882 = vmatpush.msra.mxu0 0.0
    %883 = vmatpush.msra.mxu0 %v64
    %884 = vmatpush.msra.mxu0 %v63
    %885 = vmatpush.msra.mxu0 %v62
    %886 = vmatpush.msra.mxu0 %v61
    %887 = vmatpush.msra.mxu0 %v60
    %888 = vmatpush.msra.mxu0 %v59
    %889 = vmatpush.msra.mxu0 %v58
    %890 = vmatpush.msra.mxu0 %v57
    %891 = vmatmul.f32.gmra.mxu0 %v873
    %v892 = vpop.f32.mrf.mxu0
    %v893 = vadd.f32 %v204, %v892
    %894 = vdwg.mxu0
    %v895 = vtanh.pop %v893
    %v896 = vmul.f32 %v895, %v71
    %v897 = vadd.f32 %v896, %v72
    %v898 = vmul.f32 %v897, %v813
    %900 = vrot.lane.b32.xlu0 %v897, 64
    %v901 = vpop.permute.xlu0 %900
    %v903 = vmul.f32 %v897, %v901
    %905 = vrot.lane.b32.xlu0 %v903, 32
    %v906 = vpop.permute.xlu0 %905
    %v908 = vadd.f32 %v898, %v906
    %v909 = vtanh.pop %v908
    %911 = vrot.lane.b32.xlu0 %v909, 64
    %v912 = vpop.permute.xlu0 %911
    %v914 = vmul.f32 %v897, %v912
    %v915 = vld [vmem:[#allocation3] sm:$0xff]
    %v916 = vld [vmem:[#allocation3 + $0x8] sm:$0xff]
    %v917 = vld [vmem:[#allocation3 + $0x10] sm:$0xff]
    %v918 = vld [vmem:[#allocation3 + $0x18] sm:$0xff]
    %v919 = vld [vmem:[%s7] sm:$0x1]
    %v921 = vperm.slane %v919, 0
    %924 = vrot.lane.b32.xlu0 %v914, 32
    %v925 = vpop.permute.xlu0 %924
    %v926 = vsel %vm153, %v865, 0
    %v928 = vsel %vm153, %v925, 0
    %930 = vmatpush.msra.mxu0 0.0
    %931 = vmatpush.msra.mxu0 0.0
    %932 = vmatpush.msra.mxu0 0.0
    %933 = vmatpush.msra.mxu0 0.0
    %934 = vmatpush.msra.mxu0 0.0
    %935 = vmatpush.msra.mxu0 0.0
    %936 = vmatpush.msra.mxu0 0.0
    %937 = vmatpush.msra.mxu0 0.0
    %938 = vmatpush.msra.mxu0 0.0
    %939 = vmatpush.msra.mxu0 0.0
    %940 = vmatpush.msra.mxu0 0.0
    %941 = vmatpush.msra.mxu0 0.0
    %942 = vmatpush.msra.mxu0 %v918
    %943 = vmatpush.msra.mxu0 %v917
    %944 = vmatpush.msra.mxu0 %v916
    %945 = vmatpush.msra.mxu0 %v915
    %946 = vmatmul.f32.gmra.mxu0 %v926
    %v947 = vpop.f32.mrf.mxu0
    %v948 = vadd.f32 %v921, %v947
    %949 = vmatmul.f32.gmra.mxu0 %v928
    %v950 = vpop.f32.mrf.mxu0
    %v951 = vadd.f32 %v921, %v950
    %952 = vdwg.mxu0
    %v953 = vmax.f32 %v948, 0.0
    %v954 = vmax.f32 %v951, 0.0
    %v955 = vld [vmem:[%s8] sm:$0x1]
    %v957 = vperm.slane %v955, 0
    %v959 = vmul.f32 %v953, %v957
    %v960 = vmul.f32 %v954, %v957
    %961 = vadd.xlane.f32.xlu0 %v959
    %v962 = vpop.xlane.xlu0 %961
    %963 = vadd.xlane.f32.xlu0 %v960
    %v964 = vpop.xlane.xlu0 %963
    %v965 = vld [vmem:[#allocation2] sm:$0x1]
    %v967 = vperm.slane %v965, 0
    %v969 = vadd.f32 %v962, %v967
    %v970 = vadd.f32 %v964, %v967
    %vm971 = vcmask 7168
    %972 = vst.msk [vmem:[%s10] sm:$0xff] %vm971, %v969
    %973 = vst.msk [vmem:[%s10 + $0x8] sm:$0xff] %vm971, %v970
    // Predicated region
    $region46: #{lstm_net_forward.1} parent=1 // pred_check
      _
    $region47: #{lstm_net_forward.1} parent=1 // pred_check_branch
      %975 = sbr.rel (0) target = $region49
    $region48: #{lstm_net_forward.1} parent=1 // pred_region
      _
    $region49: #{lstm_net_forward.1} parent=1 // pred_fallthru
      _
    // Predicated region
    $region50: #{lstm_net_forward.1} parent=1 // pred_check
      _
    $region51: #{lstm_net_forward.1} parent=1 // pred_check_branch
      %977 = sbr.rel (0) target = $region53
    $region52: #{lstm_net_forward.1} parent=1 // pred_region
      _
    $region53: #{lstm_net_forward.1} parent=1 // pred_fallthru
      _
    %978 = vsyncpa [#allocation4], 1

</llo_original>
